<compile_context>
chip_gen: v7x
topology: tpu7x:2x2x1
jax: 0.10.0
libtpu: 0.0.40
codegen_flags: <defaults>
</compile_context>

<pallas_src>
import jax
import jax.numpy as jnp
import numpy as np
from jax import lax
from jax.experimental import pallas as pl
from jax.experimental.pallas import tpu as pltpu

# Problem sizes (match the PyTorch module; small demo shapes).
B, L = 2, 16          # batch, sequence length
V, D = 216, 4         # vocab, embedding dim
C1, K1 = 8, 5         # Conv1d(4 -> 8, kernel 5, padding 2)
C2, K2 = 4, 3         # Conv1d(8 -> 4, kernel 3, padding 1)
H = 4                 # attention heads (head_dim = 1 -> scaling = 1.0)
N = B * L             # flattened rows: row n <-> (b = n // L, l = n % L)
NK = N                # keys per head chunk in the fused score slab
HN = H * NK           # 128 -> lane-dense fused attention slab width
OUT_PAD = 128         # lane-dense padded output width (real logits in cols 0:3)
BN_EPS = 1e-5

# ---- packed layout: one (W_ROWS, 128) f32 slab.  Each block starts on an
# 8-sublane boundary so in-kernel ref slices are tile-aligned. ----------------
_ROW, _r = {}, 0
for _name, _rows in (("w1", K1 * D), ("w2", K2 * C1), ("wqkv", D), ("wo", D),
                     ("wh", D), ("vec", 2), ("cmask", N), ("amask", N),
                     ("selk", D), ("selv", HN)):
    _ROW[_name] = (_r, _r + _rows)
    _r += -(-_rows // 8) * 8
W_ROWS = _r                                            # 280

# Column offsets inside the "vec" block, row 0 (small bias / BN-affine vectors).
_VOFF, _o = {}, 0
for _name, _w in (("conv1_b", C1), ("bn1_g", C1), ("bn1_b", C1),
                  ("conv2_b", C2), ("bn2_g", C2), ("bn2_b", C2),
                  ("in_proj_b", 3 * D), ("out_proj_b", D)):
    _VOFF[_name] = (_o, _o + _w)
    _o += _w


def cnn_attn_kernel(x_ref, wp_ref, out_ref):
    f32 = jnp.float32

    def blk(name, cols=128):
        r0, r1 = _ROW[name]
        return wp_ref[r0:r1, 0:cols]                   # tile-aligned static slice

    # ---- unpack weights & precomputed constants ------------------------------
    w1, w2 = blk("w1", C1), blk("w2", C2)              # (20,8), (24,4) tap-major
    wqkv, wo = blk("wqkv", 3 * D), blk("wo", D)        # (4,12), (4,4)
    whp = blk("wh")                                    # (4,128): head W in cols 0:3
    vec = blk("vec")                                   # (2,128)

    def vrow(name):
        c0, c1 = _VOFF[name]
        return vec[0:1, c0:c1]

    b1, g1, be1 = vrow("conv1_b"), vrow("bn1_g"), vrow("bn1_b")
    b2, g2, be2 = vrow("conv2_b"), vrow("bn2_g"), vrow("bn2_b")
    bqkv, bo = vrow("in_proj_b"), vrow("out_proj_b")
    bhp = vec[1:2, :]                                  # (1,128): head bias in cols 0:3

    cmask = blk("cmask", K1 + K2)                      # (N, 8) conv boundary keep masks
    amask = blk("amask")                               # (N, HN) additive -1e30 mask
    selk = blk("selk")                                 # (D, HN): selk[d,i] = (d == i//NK)
    selv = blk("selv", D)                              # (HN, D): selv[i,d] = (d == i//NK)

    x = x_ref[:, 0:D]                                  # (N, D) pre-gathered embeddings

    # ---- 'same'-padded Conv1d along the sequence axis ------------------------
    # K boundary-masked pltpu.roll copies (XLU); each feeds a tiny
    # (N,cin)@(cin,cout) MXU matmul accumulated in f32 (no lane concatenation).
    # The precomputed keep-mask zero-pads at sequence edges, which also kills
    # roll wraparound and any cross-sample leakage.
    def conv1d(inp, w_tap, bias, K, cin, mcol0):
        P = K // 2
        acc = None
        for k in range(K):
            d = k - P                                  # this tap reads x[l + d]
            shifted = inp if d == 0 else pltpu.roll(inp, (-d) % N, axis=0)
            tap = shifted * cmask[:, mcol0 + k:mcol0 + k + 1]
            part = jnp.dot(tap, w_tap[k * cin:(k + 1) * cin, :],
                           preferred_element_type=f32)
            acc = part if acc is None else acc + part
        return acc + bias

    def batchnorm(inp, g, be):
        # Fresh nn.BatchNorm1d in training mode: biased batch statistics over
        # all B*L positions, per channel.
        mu = jnp.mean(inp, axis=0, keepdims=True)
        var = jnp.mean((inp - mu) ** 2, axis=0, keepdims=True)
        return g * (inp - mu) * lax.rsqrt(var + BN_EPS) + be

    h = conv1d(x, w1, b1, K1, D, 0)                    # (N, 8)
    h = jax.nn.sigmoid(batchnorm(h, g1, be1))
    h = conv1d(h, w2, b2, K2, C1, K1)                  # (N, 4)
    h = batchnorm(h, g2, be2)

    # ---- multi-head self-attention: 4 heads fused into one lane-dense
    # (N, H*N) = (32, 128) score slab.  head_dim = 1 so scaling = 1.0. --------
    qkv = jnp.dot(h, wqkv, preferred_element_type=f32) + bqkv     # (N, 12)
    q, k_, v = qkv[:, 0:D], qkv[:, D:2 * D], qkv[:, 2 * D:3 * D]

    # Block-diagonal key matrix via the precomputed selector (no iota/where).
    kblk = selk * jnp.tile(jnp.transpose(k_), (1, H))             # (D, HN)
    s = jnp.dot(q, kblk, preferred_element_type=f32) + amask      # (N, HN)

    # One global row max, ONE exp pass, per-head denominators via two tiny MXU
    # matmuls (selv collapses each head chunk, selk broadcasts it back).
    m_row = jnp.max(s, axis=1, keepdims=True)
    e = jnp.exp(s - m_row)                             # masked entries -> exactly 0
    d_slab = jnp.dot(jnp.dot(e, selv, preferred_element_type=f32),
                     selk, preferred_element_type=f32)            # (N, HN)
    p = e * pl.reciprocal(d_slab, approx=True)

    # Block-diagonal value matrix via the precomputed selector.
    vblk = selv * jnp.tile(v, (H, 1))                             # (HN, D)
    attn = jnp.dot(p, vblk, preferred_element_type=f32)           # (N, D)
    o = jnp.dot(attn, wo, preferred_element_type=f32) + bo

    # ---- classification head, stored as a lane-dense (N, 128) slab ----------
    out_ref[...] = jnp.dot(o, whp, preferred_element_type=f32) + bhp


def _pack_params(p):
    """One-time host-side packing of all weights, biases and compile-time
    constants (conv keep-masks, attention mask, head selectors) into a single
    lane-dense (W_ROWS, 128) f32 slab."""
    npf = lambda a: np.asarray(a, np.float32)
    wpack = np.zeros((W_ROWS, 128), np.float32)

    def put(name, block):
        r0, _ = _ROW[name]
        block = np.asarray(block, np.float32)
        wpack[r0:r0 + block.shape[0], 0:block.shape[1]] = block

    # Conv weights folded from PyTorch NCL layout to tap-major (K*cin, cout).
    put("w1", npf(p["conv1_w"]).transpose(2, 1, 0).reshape(K1 * D, C1))
    put("w2", npf(p["conv2_w"]).transpose(2, 1, 0).reshape(K2 * C1, C2))
    put("wqkv", npf(p["in_proj_w"]).T)
    put("wo", npf(p["out_proj_w"]).T)
    wh = np.zeros((D, 128), np.float32)
    wh[:, 0:3] = npf(p["head_w"]).T
    put("wh", wh)

    vec = np.zeros((2, 128), np.float32)
    for name, (c0, c1) in _VOFF.items():
        vec[0, c0:c1] = npf(p[name])
    vec[1, 0:3] = npf(p["head_b"])
    put("vec", vec)

    # Constant masks / selectors (precomputed once, per perf review).
    pos = np.arange(N) % L
    cmask = np.zeros((N, K1 + K2), np.float32)
    for k in range(K1):
        d = k - K1 // 2
        cmask[:, k] = (pos + d >= 0) & (pos + d < L)
    for k in range(K2):
        d = k - K2 // 2
        cmask[:, K1 + k] = (pos + d >= 0) & (pos + d < L)
    put("cmask", cmask)

    lane = np.arange(HN)
    amask = np.where((np.arange(N)[:, None] // L) == ((lane % NK)[None, :] // L),
                     0.0, -1e30).astype(np.float32)
    put("amask", amask)

    selk = (np.arange(D)[:, None] == (lane // NK)[None, :]).astype(np.float32)
    put("selk", selk)       # (D, HN)
    put("selv", selk.T)     # (HN, D)

    return jnp.asarray(wpack)


def _forward(tok, emb, wpack):
    """tok: (B, L) int32 token ids -> (B, L, 3) float32."""
    # Embedding gather hoisted out of the kernel (one XLA gather), padded to a
    # lane-dense (N, 128) slab so its DMA is a single contiguous copy.
    x = emb[tok.reshape(N)].astype(jnp.float32)                   # (N, D)
    x_pad = jnp.pad(x, ((0, 0), (0, OUT_PAD - D)))                # (N, 128)
    out = pl.pallas_call(
        cnn_attn_kernel,
        out_shape=jax.ShapeDtypeStruct((N, OUT_PAD), jnp.float32),
        in_specs=[
            pl.BlockSpec(memory_space=pltpu.MemorySpace.VMEM),    # gathered embeddings
            pl.BlockSpec(memory_space=pltpu.MemorySpace.VMEM),    # packed weights+consts
        ],
        out_specs=pl.BlockSpec(memory_space=pltpu.MemorySpace.VMEM),
    )(x_pad, wpack)
    return out[:, :3].reshape(B, L, 3)


cnn_attn_forward = jax.jit(_forward)


def init_params(key):
    ks = jax.random.split(key, 11)
    return {
        "emb":        jax.random.normal(ks[0], (V, D), jnp.float32),
        "conv1_w":    0.3 * jax.random.normal(ks[1], (C1, D, K1), jnp.float32),
        "conv1_b":    0.1 * jax.random.normal(ks[2], (C1,), jnp.float32),
        "conv2_w":    0.3 * jax.random.normal(ks[3], (C2, C1, K2), jnp.float32),
        "conv2_b":    0.1 * jax.random.normal(ks[4], (C2,), jnp.float32),
        "bn1_g":      jnp.ones((C1,), jnp.float32),
        "bn1_b":      jnp.zeros((C1,), jnp.float32),
        "bn2_g":      jnp.ones((C2,), jnp.float32),
        "bn2_b":      jnp.zeros((C2,), jnp.float32),
        "in_proj_w":  0.5 * jax.random.normal(ks[5], (3 * D, D), jnp.float32),
        "in_proj_b":  0.1 * jax.random.normal(ks[6], (3 * D,), jnp.float32),
        "out_proj_w": 0.5 * jax.random.normal(ks[7], (D, D), jnp.float32),
        "out_proj_b": 0.1 * jax.random.normal(ks[8], (D,), jnp.float32),
        "head_w":     0.5 * jax.random.normal(ks[9], (3, D), jnp.float32),
        "head_b":     0.1 * jax.random.normal(ks[10], (3,), jnp.float32),
    }


def reference_forward(tok, p):
    """Pure-JAX reference mirroring the PyTorch forward (training-mode BN)."""
    hp = lax.Precision.HIGHEST

    def conv(h, w, b, pad):
        return lax.conv_general_dilated(
            h, w, (1,), [(pad, pad)],
            dimension_numbers=("NCH", "OIH", "NCH"), precision=hp
        ) + b[None, :, None]

    def bn(h, g, bta):
        mu = jnp.mean(h, axis=(0, 2), keepdims=True)
        var = jnp.mean((h - mu) ** 2, axis=(0, 2), keepdims=True)
        return g[None, :, None] * (h - mu) / jnp.sqrt(var + BN_EPS) + bta[None, :, None]

    x = p["emb"][tok]                              # (B, L, D)
    h = jnp.transpose(x, (0, 2, 1))                # (B, D, L) -- NCL
    h = bn(conv(h, p["conv1_w"], p["conv1_b"], 2), p["bn1_g"], p["bn1_b"])
    h = jax.nn.sigmoid(h)
    h = bn(conv(h, p["conv2_w"], p["conv2_b"], 1), p["bn2_g"], p["bn2_b"])
    x = jnp.transpose(h, (0, 2, 1))                # (B, L, D)

    qkv = jnp.einsum("bld,ed->ble", x, p["in_proj_w"], precision=hp) + p["in_proj_b"]
    q, k, v = qkv[..., :D], qkv[..., D:2 * D], qkv[..., 2 * D:]
    qh, kh, vh = (t.reshape(B, L, H, 1) for t in (q, k, v))
    s = jnp.einsum("blhd,bmhd->bhlm", qh, kh, precision=hp)   # scale = 1 (head_dim 1)
    a = jax.nn.softmax(s, axis=-1)
    o = jnp.einsum("bhlm,bmhd->blhd", a, vh, precision=hp).reshape(B, L, D)
    o = jnp.einsum("bld,ed->ble", o, p["out_proj_w"], precision=hp) + p["out_proj_b"]
    return jnp.einsum("bld,ed->ble", o, p["head_w"], precision=hp) + p["head_b"]


if __name__ == "__main__":
    key = jax.random.PRNGKey(0)
    pkey, tkey = jax.random.split(key)
    params = init_params(pkey)
    tok = jax.random.randint(tkey, (B, L), 0, V, dtype=jnp.int32)

    wpack = _pack_params(params)                   # packed ONCE, reused per call

    out = jax.block_until_ready(cnn_attn_forward(tok, params["emb"], wpack))
    ref = jax.block_until_ready(reference_forward(tok, params))

    assert out.shape == (B, L, 3) and out.dtype == jnp.float32
    assert bool(jnp.all(jnp.isfinite(out)))
    max_err = float(jnp.max(jnp.abs(out - ref)))
    assert max_err < 2e-2, f"mismatch vs reference: max abs err {max_err}"
    print("KERNEL_OK")
</pallas_src>

<mosaic_0001>
module attributes {stable_mosaic.version = 11 : i64} {
  func.func @cnn_attn_kernel(%arg0: memref<32x128xf32, #tpu.memory_space<vmem>>, %arg1: memref<280x128xf32, #tpu.memory_space<vmem>>, %arg2: memref<32x128xf32, #tpu.memory_space<vmem>>) attributes {dimension_semantics = [], scalar_prefetch = 0 : i64, scratch_operands = 0 : i64, tpu.core_type = #tpu.core_type<tc>} {
    %c0 = arith.constant 0 : index
    %c0_0 = arith.constant 0 : index
    %0 = vector.load %arg1[%c0, %c0_0] : memref<280x128xf32, #tpu.memory_space<vmem>>, vector<20x8xf32>
    %c24 = arith.constant 24 : index
    %c0_1 = arith.constant 0 : index
    %1 = vector.load %arg1[%c24, %c0_1] : memref<280x128xf32, #tpu.memory_space<vmem>>, vector<24x4xf32>
    %c48 = arith.constant 48 : index
    %c0_2 = arith.constant 0 : index
    %2 = vector.load %arg1[%c48, %c0_2] : memref<280x128xf32, #tpu.memory_space<vmem>>, vector<4x12xf32>
    %c56 = arith.constant 56 : index
    %c0_3 = arith.constant 0 : index
    %3 = vector.load %arg1[%c56, %c0_3] : memref<280x128xf32, #tpu.memory_space<vmem>>, vector<4x4xf32>
    %c64 = arith.constant 64 : index
    %c0_4 = arith.constant 0 : index
    %4 = vector.load %arg1[%c64, %c0_4] : memref<280x128xf32, #tpu.memory_space<vmem>>, vector<4x128xf32>
    %c72 = arith.constant 72 : index
    %c0_5 = arith.constant 0 : index
    %5 = vector.load %arg1[%c72, %c0_5] : memref<280x128xf32, #tpu.memory_space<vmem>>, vector<2x128xf32>
    %6 = vector.extract_strided_slice %5 {offsets = [0, 0], sizes = [1, 8], strides = [1, 1]} : vector<2x128xf32> to vector<1x8xf32>
    %7 = vector.extract_strided_slice %5 {offsets = [0, 8], sizes = [1, 8], strides = [1, 1]} : vector<2x128xf32> to vector<1x8xf32>
    %8 = vector.extract_strided_slice %5 {offsets = [0, 16], sizes = [1, 8], strides = [1, 1]} : vector<2x128xf32> to vector<1x8xf32>
    %9 = vector.extract_strided_slice %5 {offsets = [0, 24], sizes = [1, 4], strides = [1, 1]} : vector<2x128xf32> to vector<1x4xf32>
    %10 = vector.extract_strided_slice %5 {offsets = [0, 28], sizes = [1, 4], strides = [1, 1]} : vector<2x128xf32> to vector<1x4xf32>
    %11 = vector.extract_strided_slice %5 {offsets = [0, 32], sizes = [1, 4], strides = [1, 1]} : vector<2x128xf32> to vector<1x4xf32>
    %12 = vector.extract_strided_slice %5 {offsets = [0, 36], sizes = [1, 12], strides = [1, 1]} : vector<2x128xf32> to vector<1x12xf32>
    %13 = vector.extract_strided_slice %5 {offsets = [0, 48], sizes = [1, 4], strides = [1, 1]} : vector<2x128xf32> to vector<1x4xf32>
    %14 = vector.extract_strided_slice %5 {offsets = [1, 0], sizes = [1, 128], strides = [1, 1]} : vector<2x128xf32> to vector<1x128xf32>
    %c80 = arith.constant 80 : index
    %c0_6 = arith.constant 0 : index
    %15 = vector.load %arg1[%c80, %c0_6] : memref<280x128xf32, #tpu.memory_space<vmem>>, vector<32x8xf32>
    %c112 = arith.constant 112 : index
    %c0_7 = arith.constant 0 : index
    %16 = vector.load %arg1[%c112, %c0_7] : memref<280x128xf32, #tpu.memory_space<vmem>>, vector<32x128xf32>
    %c144 = arith.constant 144 : index
    %c0_8 = arith.constant 0 : index
    %17 = vector.load %arg1[%c144, %c0_8] : memref<280x128xf32, #tpu.memory_space<vmem>>, vector<4x128xf32>
    %c152 = arith.constant 152 : index
    %c0_9 = arith.constant 0 : index
    %18 = vector.load %arg1[%c152, %c0_9] : memref<280x128xf32, #tpu.memory_space<vmem>>, vector<128x4xf32>
    %c0_10 = arith.constant 0 : index
    %c0_11 = arith.constant 0 : index
    %19 = vector.load %arg0[%c0_10, %c0_11] : memref<32x128xf32, #tpu.memory_space<vmem>>, vector<32x4xf32>
    %c2_i32 = arith.constant 2 : i32
    %20 = tpu.dynamic_rotate %19 by %c2_i32 dim 0 : vector<32x4xf32>, i32 -> vector<32x4xf32>
    %21 = vector.extract_strided_slice %15 {offsets = [0, 0], sizes = [32, 1], strides = [1, 1]} : vector<32x8xf32> to vector<32x1xf32>
    %22 = vector.broadcast %21 : vector<32x1xf32> to vector<32x4xf32>
    %23 = arith.mulf %20, %22 : vector<32x4xf32>
    %24 = vector.extract_strided_slice %0 {offsets = [0, 0], sizes = [4, 8], strides = [1, 1]} : vector<20x8xf32> to vector<4x8xf32>
    %cst = arith.constant dense<0.000000e+00> : vector<32x8xf32>
    %25 = tpu.matmul %23, %24, %cst {dimension_numbers = #tpu.dot_dimension_numbers<[1], [0], [0], [1], [0, 0, 1, 1], [], []>} : vector<32x4xf32>, vector<4x8xf32>, vector<32x8xf32> -> vector<32x8xf32>
    %c1_i32 = arith.constant 1 : i32
    %26 = tpu.dynamic_rotate %19 by %c1_i32 dim 0 : vector<32x4xf32>, i32 -> vector<32x4xf32>
    %27 = vector.extract_strided_slice %15 {offsets = [0, 1], sizes = [32, 1], strides = [1, 1]} : vector<32x8xf32> to vector<32x1xf32>
    %28 = vector.broadcast %27 : vector<32x1xf32> to vector<32x4xf32>
    %29 = arith.mulf %26, %28 : vector<32x4xf32>
    %30 = vector.extract_strided_slice %0 {offsets = [4, 0], sizes = [4, 8], strides = [1, 1]} : vector<20x8xf32> to vector<4x8xf32>
    %cst_12 = arith.constant dense<0.000000e+00> : vector<32x8xf32>
    %31 = tpu.matmul %29, %30, %cst_12 {dimension_numbers = #tpu.dot_dimension_numbers<[1], [0], [0], [1], [0, 0, 1, 1], [], []>} : vector<32x4xf32>, vector<4x8xf32>, vector<32x8xf32> -> vector<32x8xf32>
    %32 = arith.addf %25, %31 : vector<32x8xf32>
    %33 = vector.extract_strided_slice %15 {offsets = [0, 2], sizes = [32, 1], strides = [1, 1]} : vector<32x8xf32> to vector<32x1xf32>
    %34 = vector.broadcast %33 : vector<32x1xf32> to vector<32x4xf32>
    %35 = arith.mulf %19, %34 : vector<32x4xf32>
    %36 = vector.extract_strided_slice %0 {offsets = [8, 0], sizes = [4, 8], strides = [1, 1]} : vector<20x8xf32> to vector<4x8xf32>
    %cst_13 = arith.constant dense<0.000000e+00> : vector<32x8xf32>
    %37 = tpu.matmul %35, %36, %cst_13 {dimension_numbers = #tpu.dot_dimension_numbers<[1], [0], [0], [1], [0, 0, 1, 1], [], []>} : vector<32x4xf32>, vector<4x8xf32>, vector<32x8xf32> -> vector<32x8xf32>
    %38 = arith.addf %32, %37 : vector<32x8xf32>
    %c31_i32 = arith.constant 31 : i32
    %39 = tpu.dynamic_rotate %19 by %c31_i32 dim 0 : vector<32x4xf32>, i32 -> vector<32x4xf32>
    %40 = vector.extract_strided_slice %15 {offsets = [0, 3], sizes = [32, 1], strides = [1, 1]} : vector<32x8xf32> to vector<32x1xf32>
    %41 = vector.broadcast %40 : vector<32x1xf32> to vector<32x4xf32>
    %42 = arith.mulf %39, %41 : vector<32x4xf32>
    %43 = vector.extract_strided_slice %0 {offsets = [12, 0], sizes = [4, 8], strides = [1, 1]} : vector<20x8xf32> to vector<4x8xf32>
    %cst_14 = arith.constant dense<0.000000e+00> : vector<32x8xf32>
    %44 = tpu.matmul %42, %43, %cst_14 {dimension_numbers = #tpu.dot_dimension_numbers<[1], [0], [0], [1], [0, 0, 1, 1], [], []>} : vector<32x4xf32>, vector<4x8xf32>, vector<32x8xf32> -> vector<32x8xf32>
    %45 = arith.addf %38, %44 : vector<32x8xf32>
    %c30_i32 = arith.constant 30 : i32
    %46 = tpu.dynamic_rotate %19 by %c30_i32 dim 0 : vector<32x4xf32>, i32 -> vector<32x4xf32>
    %47 = vector.extract_strided_slice %15 {offsets = [0, 4], sizes = [32, 1], strides = [1, 1]} : vector<32x8xf32> to vector<32x1xf32>
    %48 = vector.broadcast %47 : vector<32x1xf32> to vector<32x4xf32>
    %49 = arith.mulf %46, %48 : vector<32x4xf32>
    %50 = vector.extract_strided_slice %0 {offsets = [16, 0], sizes = [4, 8], strides = [1, 1]} : vector<20x8xf32> to vector<4x8xf32>
    %cst_15 = arith.constant dense<0.000000e+00> : vector<32x8xf32>
    %51 = tpu.matmul %49, %50, %cst_15 {dimension_numbers = #tpu.dot_dimension_numbers<[1], [0], [0], [1], [0, 0, 1, 1], [], []>} : vector<32x4xf32>, vector<4x8xf32>, vector<32x8xf32> -> vector<32x8xf32>
    %52 = arith.addf %45, %51 : vector<32x8xf32>
    %53 = vector.broadcast %6 : vector<1x8xf32> to vector<32x8xf32>
    %54 = arith.addf %52, %53 : vector<32x8xf32>
    %cst_16 = arith.constant dense<0.000000e+00> : vector<8xf32>
    %55 = vector.multi_reduction <add>, %54, %cst_16 [0] : vector<32x8xf32> to vector<8xf32>
    %56 = vector.shape_cast %55 : vector<8xf32> to vector<1x8xf32>
    %cst_17 = arith.constant 3.200000e+01 : f32
    %57 = vector.broadcast %cst_17 : f32 to vector<1x8xf32>
    %58 = arith.divf %56, %57 : vector<1x8xf32>
    %59 = vector.broadcast %58 : vector<1x8xf32> to vector<32x8xf32>
    %60 = arith.subf %54, %59 : vector<32x8xf32>
    %61 = arith.mulf %60, %60 : vector<32x8xf32>
    %cst_18 = arith.constant dense<0.000000e+00> : vector<8xf32>
    %62 = vector.multi_reduction <add>, %61, %cst_18 [0] : vector<32x8xf32> to vector<8xf32>
    %63 = vector.shape_cast %62 : vector<8xf32> to vector<1x8xf32>
    %cst_19 = arith.constant 3.200000e+01 : f32
    %64 = vector.broadcast %cst_19 : f32 to vector<1x8xf32>
    %65 = arith.divf %63, %64 : vector<1x8xf32>
    %66 = vector.broadcast %58 : vector<1x8xf32> to vector<32x8xf32>
    %67 = arith.subf %54, %66 : vector<32x8xf32>
    %68 = vector.broadcast %7 : vector<1x8xf32> to vector<32x8xf32>
    %69 = arith.mulf %68, %67 : vector<32x8xf32>
    %cst_20 = arith.constant 9.99999974E-6 : f32
    %70 = vector.broadcast %cst_20 : f32 to vector<1x8xf32>
    %71 = arith.addf %65, %70 : vector<1x8xf32>
    %72 = math.rsqrt %71 : vector<1x8xf32>
    %73 = vector.broadcast %72 : vector<1x8xf32> to vector<32x8xf32>
    %74 = arith.mulf %69, %73 : vector<32x8xf32>
    %75 = vector.broadcast %8 : vector<1x8xf32> to vector<32x8xf32>
    %76 = arith.addf %74, %75 : vector<32x8xf32>
    %77 = arith.negf %76 : vector<32x8xf32>
    %78 = math.exp %77 : vector<32x8xf32>
    %cst_21 = arith.constant 1.000000e+00 : f32
    %79 = vector.broadcast %cst_21 : f32 to vector<32x8xf32>
    %80 = arith.addf %79, %78 : vector<32x8xf32>
    %81 = arith.divf %79, %80 : vector<32x8xf32>
    %c1_i32_22 = arith.constant 1 : i32
    %82 = tpu.dynamic_rotate %81 by %c1_i32_22 dim 0 : vector<32x8xf32>, i32 -> vector<32x8xf32>
    %83 = vector.extract_strided_slice %15 {offsets = [0, 5], sizes = [32, 1], strides = [1, 1]} : vector<32x8xf32> to vector<32x1xf32>
    %84 = vector.broadcast %83 : vector<32x1xf32> to vector<32x8xf32>
    %85 = arith.mulf %82, %84 : vector<32x8xf32>
    %86 = vector.extract_strided_slice %1 {offsets = [0, 0], sizes = [8, 4], strides = [1, 1]} : vector<24x4xf32> to vector<8x4xf32>
    %cst_23 = arith.constant dense<0.000000e+00> : vector<32x4xf32>
    %87 = tpu.matmul %85, %86, %cst_23 {dimension_numbers = #tpu.dot_dimension_numbers<[1], [0], [0], [1], [0, 0, 1, 1], [], []>} : vector<32x8xf32>, vector<8x4xf32>, vector<32x4xf32> -> vector<32x4xf32>
    %88 = vector.extract_strided_slice %15 {offsets = [0, 6], sizes = [32, 1], strides = [1, 1]} : vector<32x8xf32> to vector<32x1xf32>
    %89 = vector.broadcast %88 : vector<32x1xf32> to vector<32x8xf32>
    %90 = arith.mulf %81, %89 : vector<32x8xf32>
    %91 = vector.extract_strided_slice %1 {offsets = [8, 0], sizes = [8, 4], strides = [1, 1]} : vector<24x4xf32> to vector<8x4xf32>
    %cst_24 = arith.constant dense<0.000000e+00> : vector<32x4xf32>
    %92 = tpu.matmul %90, %91, %cst_24 {dimension_numbers = #tpu.dot_dimension_numbers<[1], [0], [0], [1], [0, 0, 1, 1], [], []>} : vector<32x8xf32>, vector<8x4xf32>, vector<32x4xf32> -> vector<32x4xf32>
    %93 = arith.addf %87, %92 : vector<32x4xf32>
    %c31_i32_25 = arith.constant 31 : i32
    %94 = tpu.dynamic_rotate %81 by %c31_i32_25 dim 0 : vector<32x8xf32>, i32 -> vector<32x8xf32>
    %95 = vector.extract_strided_slice %15 {offsets = [0, 7], sizes = [32, 1], strides = [1, 1]} : vector<32x8xf32> to vector<32x1xf32>
    %96 = vector.broadcast %95 : vector<32x1xf32> to vector<32x8xf32>
    %97 = arith.mulf %94, %96 : vector<32x8xf32>
    %98 = vector.extract_strided_slice %1 {offsets = [16, 0], sizes = [8, 4], strides = [1, 1]} : vector<24x4xf32> to vector<8x4xf32>
    %cst_26 = arith.constant dense<0.000000e+00> : vector<32x4xf32>
    %99 = tpu.matmul %97, %98, %cst_26 {dimension_numbers = #tpu.dot_dimension_numbers<[1], [0], [0], [1], [0, 0, 1, 1], [], []>} : vector<32x8xf32>, vector<8x4xf32>, vector<32x4xf32> -> vector<32x4xf32>
    %100 = arith.addf %93, %99 : vector<32x4xf32>
    %101 = vector.broadcast %9 : vector<1x4xf32> to vector<32x4xf32>
    %102 = arith.addf %100, %101 : vector<32x4xf32>
    %cst_27 = arith.constant dense<0.000000e+00> : vector<4xf32>
    %103 = vector.multi_reduction <add>, %102, %cst_27 [0] : vector<32x4xf32> to vector<4xf32>
    %104 = vector.shape_cast %103 : vector<4xf32> to vector<1x4xf32>
    %cst_28 = arith.constant 3.200000e+01 : f32
    %105 = vector.broadcast %cst_28 : f32 to vector<1x4xf32>
    %106 = arith.divf %104, %105 : vector<1x4xf32>
    %107 = vector.broadcast %106 : vector<1x4xf32> to vector<32x4xf32>
    %108 = arith.subf %102, %107 : vector<32x4xf32>
    %109 = arith.mulf %108, %108 : vector<32x4xf32>
    %cst_29 = arith.constant dense<0.000000e+00> : vector<4xf32>
    %110 = vector.multi_reduction <add>, %109, %cst_29 [0] : vector<32x4xf32> to vector<4xf32>
    %111 = vector.shape_cast %110 : vector<4xf32> to vector<1x4xf32>
    %cst_30 = arith.constant 3.200000e+01 : f32
    %112 = vector.broadcast %cst_30 : f32 to vector<1x4xf32>
    %113 = arith.divf %111, %112 : vector<1x4xf32>
    %114 = vector.broadcast %106 : vector<1x4xf32> to vector<32x4xf32>
    %115 = arith.subf %102, %114 : vector<32x4xf32>
    %116 = vector.broadcast %10 : vector<1x4xf32> to vector<32x4xf32>
    %117 = arith.mulf %116, %115 : vector<32x4xf32>
    %cst_31 = arith.constant 9.99999974E-6 : f32
    %118 = vector.broadcast %cst_31 : f32 to vector<1x4xf32>
    %119 = arith.addf %113, %118 : vector<1x4xf32>
    %120 = math.rsqrt %119 : vector<1x4xf32>
    %121 = vector.broadcast %120 : vector<1x4xf32> to vector<32x4xf32>
    %122 = arith.mulf %117, %121 : vector<32x4xf32>
    %123 = vector.broadcast %11 : vector<1x4xf32> to vector<32x4xf32>
    %124 = arith.addf %122, %123 : vector<32x4xf32>
    %cst_32 = arith.constant dense<0.000000e+00> : vector<32x12xf32>
    %125 = tpu.matmul %124, %2, %cst_32 {dimension_numbers = #tpu.dot_dimension_numbers<[1], [0], [0], [1], [0, 0, 1, 1], [], []>} : vector<32x4xf32>, vector<4x12xf32>, vector<32x12xf32> -> vector<32x12xf32>
    %126 = vector.broadcast %12 : vector<1x12xf32> to vector<32x12xf32>
    %127 = arith.addf %125, %126 : vector<32x12xf32>
    %128 = vector.extract_strided_slice %127 {offsets = [0, 0], sizes = [32, 4], strides = [1, 1]} : vector<32x12xf32> to vector<32x4xf32>
    %129 = vector.extract_strided_slice %127 {offsets = [0, 4], sizes = [32, 4], strides = [1, 1]} : vector<32x12xf32> to vector<32x4xf32>
    %130 = vector.extract_strided_slice %127 {offsets = [0, 8], sizes = [32, 4], strides = [1, 1]} : vector<32x12xf32> to vector<32x4xf32>
    %131 = tpu.transpose %129, [1, 0] : vector<32x4xf32> -> vector<4x32xf32>
    %132 = tpu.concatenate %131, %131, %131, %131 in 1 : vector<4x32xf32>, vector<4x32xf32>, vector<4x32xf32>, vector<4x32xf32> -> vector<4x128xf32>
    %133 = arith.mulf %17, %132 : vector<4x128xf32>
    %cst_33 = arith.constant dense<0.000000e+00> : vector<32x128xf32>
    %134 = tpu.matmul %128, %133, %cst_33 {dimension_numbers = #tpu.dot_dimension_numbers<[1], [0], [0], [1], [0, 0, 1, 1], [], []>} : vector<32x4xf32>, vector<4x128xf32>, vector<32x128xf32> -> vector<32x128xf32>
    %135 = arith.addf %134, %16 : vector<32x128xf32>
    %cst_34 = arith.constant dense<0xFF800000> : vector<32xf32>
    %136 = vector.multi_reduction <maximumf>, %135, %cst_34 [1] : vector<32x128xf32> to vector<32xf32>
    %137 = vector.shape_cast %136 : vector<32xf32> to vector<32x1xf32>
    %138 = vector.broadcast %137 : vector<32x1xf32> to vector<32x128xf32>
    %139 = arith.subf %135, %138 : vector<32x128xf32>
    %140 = math.exp %139 : vector<32x128xf32>
    %cst_35 = arith.constant dense<0.000000e+00> : vector<32x4xf32>
    %141 = tpu.matmul %140, %18, %cst_35 {dimension_numbers = #tpu.dot_dimension_numbers<[1], [0], [0], [1], [0, 0, 1, 1], [], []>} : vector<32x128xf32>, vector<128x4xf32>, vector<32x4xf32> -> vector<32x4xf32>
    %cst_36 = arith.constant dense<0.000000e+00> : vector<32x128xf32>
    %142 = tpu.matmul %141, %17, %cst_36 {dimension_numbers = #tpu.dot_dimension_numbers<[1], [0], [0], [1], [0, 0, 1, 1], [], []>} : vector<32x4xf32>, vector<4x128xf32>, vector<32x128xf32> -> vector<32x128xf32>
    %143 = tpu.reciprocal %142 {approx = true} : vector<32x128xf32> -> vector<32x128xf32>
    %144 = arith.mulf %140, %143 : vector<32x128xf32>
    %145 = tpu.concatenate %130, %130, %130, %130 in 0 : vector<32x4xf32>, vector<32x4xf32>, vector<32x4xf32>, vector<32x4xf32> -> vector<128x4xf32>
    %146 = arith.mulf %18, %145 : vector<128x4xf32>
    %cst_37 = arith.constant dense<0.000000e+00> : vector<32x4xf32>
    %147 = tpu.matmul %144, %146, %cst_37 {dimension_numbers = #tpu.dot_dimension_numbers<[1], [0], [0], [1], [0, 0, 1, 1], [], []>} : vector<32x128xf32>, vector<128x4xf32>, vector<32x4xf32> -> vector<32x4xf32>
    %cst_38 = arith.constant dense<0.000000e+00> : vector<32x4xf32>
    %148 = tpu.matmul %147, %3, %cst_38 {dimension_numbers = #tpu.dot_dimension_numbers<[1], [0], [0], [1], [0, 0, 1, 1], [], []>} : vector<32x4xf32>, vector<4x4xf32>, vector<32x4xf32> -> vector<32x4xf32>
    %149 = vector.broadcast %13 : vector<1x4xf32> to vector<32x4xf32>
    %150 = arith.addf %148, %149 : vector<32x4xf32>
    %cst_39 = arith.constant dense<0.000000e+00> : vector<32x128xf32>
    %151 = tpu.matmul %150, %4, %cst_39 {dimension_numbers = #tpu.dot_dimension_numbers<[1], [0], [0], [1], [0, 0, 1, 1], [], []>} : vector<32x4xf32>, vector<4x128xf32>, vector<32x128xf32> -> vector<32x128xf32>
    %152 = vector.broadcast %14 : vector<1x128xf32> to vector<32x128xf32>
    %153 = arith.addf %151, %152 : vector<32x128xf32>
    %c0_40 = arith.constant 0 : index
    %c0_41 = arith.constant 0 : index
    %154 = vector.load %arg2[%c0_40, %c0_41] : memref<32x128xf32, #tpu.memory_space<vmem>>, vector<32x128xf32>
    tpu.vector_store %arg2[%c0_40, %c0_41], %153 {strides = array<i32>} : memref<32x128xf32, #tpu.memory_space<vmem>>, vector<32x128xf32>,
    return
  }
}

</mosaic_0001>

<llo_original>
// kernel: _forward.1
$region0: #{_forward.1}
  #allocation0 [shape = 'u32[]', space=smem, size = 0x4, offset = 0x4, fixed_abs, tag = 'smem constant byte address 0x4 - core index']
  #allocation1 [shape = 'u32[144,128]{1,0:T(1,128)}', space=vmem, size = 0x12000, scoped, tag = 'internal scratch']
  %s0 = inlined_call_operand.vmem [shape: f32[32,128], index: 0, kind: input, shape index: {}]
  %s1 = inlined_call_operand.vmem [shape: f32[280,128], index: 1, kind: input, shape index: {}]
  %s2 = inlined_call_operand.vmem [shape: f32[32,128], index: 2, kind: output, shape index: {}]
  %s3 = sld [smem:[#allocation0]]
  $region18: #{_forward.1} parent=0
    _
  %s5 = ssub.s32 1, %s3
  %s6 = scalar_select 0, %s5, %s3
  // Predicated region
  $region2: #{_forward.1} parent=0 // pred_check
    _
  $region3: #{_forward.1} parent=0 // pred_check_branch
    %8 = sbr.rel (0) target = $region5
  $region4: #{_forward.1} parent=0 // pred_region
    _
  $region5: #{_forward.1} parent=0 // pred_fallthru
    _
  // Predicated region
  $region6: #{_forward.1} parent=0 // pred_check
    _
  $region7: #{_forward.1} parent=0 // pred_check_branch
    %10 = sbr.rel (0) target = $region9
  $region8: #{_forward.1} parent=0 // pred_region
    _
  $region9: #{_forward.1} parent=0 // pred_fallthru
    _
  %v11 = vld [vmem:[%s1] sm:$0xff]
  %v12 = vld [vmem:[%s1 + $0x8] sm:$0xff]
  %v13 = vld [vmem:[%s1 + $0x10] sm:$0xf]
  %v14 = vld [vmem:[%s1 + $0x18] sm:$0xff]
  %v15 = vld [vmem:[%s1 + $0x20] sm:$0xff]
  %v16 = vld [vmem:[%s1 + $0x28] sm:$0xff]
  %v17 = vld [vmem:[%s1 + $0x30] sm:$0xf]
  %v18 = vld [vmem:[%s1 + $0x38] sm:$0xf]
  %v19 = vld [vmem:[%s1 + $0x40] sm:$0xf]
  %v20 = vld [vmem:[%s1 + $0x48] sm:$0x3]
  %v21 = vld [vmem:[%s1 + $0x50] sm:$0xff]
  %v22 = vld [vmem:[%s1 + $0x58] sm:$0xff]
  %v23 = vld [vmem:[%s1 + $0x60] sm:$0xff]
  %v24 = vld [vmem:[%s1 + $0x68] sm:$0xff]
  %v25 = vld [vmem:[%s1 + $0x70] sm:$0xff]
  %v26 = vld [vmem:[%s1 + $0x78] sm:$0xff]
  %v27 = vld [vmem:[%s1 + $0x80] sm:$0xff]
  %v28 = vld [vmem:[%s1 + $0x88] sm:$0xff]
  %v29 = vld [vmem:[%s1 + $0x90] sm:$0xf]
  %v30 = vld [vmem:[%s1 + $0x98] sm:$0xff]
  %v31 = vld [vmem:[%s1 + $0xa0] sm:$0xff]
  %v32 = vld [vmem:[%s1 + $0xa8] sm:$0xff]
  %v33 = vld [vmem:[%s1 + $0xb0] sm:$0xff]
  %v34 = vld [vmem:[%s1 + $0xb8] sm:$0xff]
  %v35 = vld [vmem:[%s1 + $0xc0] sm:$0xff]
  %v36 = vld [vmem:[%s1 + $0xc8] sm:$0xff]
  %v37 = vld [vmem:[%s1 + $0xd0] sm:$0xff]
  %v38 = vld [vmem:[%s1 + $0xd8] sm:$0xff]
  %v39 = vld [vmem:[%s1 + $0xe0] sm:$0xff]
  %v40 = vld [vmem:[%s1 + $0xe8] sm:$0xff]
  %v41 = vld [vmem:[%s1 + $0xf0] sm:$0xff]
  %v42 = vld [vmem:[%s1 + $0xf8] sm:$0xff]
  %v43 = vld [vmem:[%s1 + $0x100] sm:$0xff]
  %v44 = vld [vmem:[%s1 + $0x108] sm:$0xff]
  %v45 = vld [vmem:[%s1 + $0x110] sm:$0xff]
  %v46 = vld [vmem:[%s0] sm:$0xff]
  %v47 = vld [vmem:[%s0 + $0x8] sm:$0xff]
  %v48 = vld [vmem:[%s0 + $0x10] sm:$0xff]
  %v49 = vld [vmem:[%s0 + $0x18] sm:$0xff]
  %v50 = vrot.slane %v46, 6
  %v51 = vrot.slane %v47, 6
  %v52 = vrot.slane %v48, 6
  %v53 = vrot.slane %v49, 6
  %v54 = vlaneseq
  %v55 = vshrl.u32 %v54, 7
  %vm56 = vcmp.lt.s32.totalorder %v55, 2
  %v57 = vsel %vm56, %v52, %v53
  %v58 = vsel %vm56, %v51, %v52
  %v59 = vsel %vm56, %v50, %v51
  %v60 = vsel %vm56, %v53, %v50
  %62 = vset.pattern.permute.xlu0 0
  %63 = vperm.xlu0 %62, %v21
  %v64 = vpop.permute.xlu0 %63
  %67 = vset.pattern.permute.xlu0 0
  %68 = vperm.xlu0 %67, %v22
  %v69 = vpop.permute.xlu0 %68
  %72 = vset.pattern.permute.xlu0 0
  %73 = vperm.xlu0 %72, %v23
  %v74 = vpop.permute.xlu0 %73
  %77 = vset.pattern.permute.xlu0 0
  %78 = vperm.xlu0 %77, %v24
  %v79 = vpop.permute.xlu0 %78
  %v81 = vmul.f32 %v60, %v64
  %v82 = vmul.f32 %v59, %v69
  %v83 = vmul.f32 %v58, %v74
  %v84 = vmul.f32 %v57, %v79
  %v85 = vrot.slane %v46, 7
  %v86 = vrot.slane %v47, 7
  %v87 = vrot.slane %v48, 7
  %v88 = vrot.slane %v49, 7
  %vm89 = vcmp.lt.s32.totalorder %v55, 1
  %v90 = vsel %vm89, %v87, %v88
  %v91 = vsel %vm89, %v86, %v87
  %v92 = vsel %vm89, %v85, %v86
  %v93 = vsel %vm89, %v88, %v85
  %94 = vset.pattern.permute.xlu0 1
  %95 = vperm.xlu0 %94, %v21
  %v96 = vpop.permute.xlu0 %95
  %98 = vset.pattern.permute.xlu0 1
  %99 = vperm.xlu0 %98, %v22
  %v100 = vpop.permute.xlu0 %99
  %102 = vset.pattern.permute.xlu0 1
  %103 = vperm.xlu0 %102, %v23
  %v104 = vpop.permute.xlu0 %103
  %106 = vset.pattern.permute.xlu0 1
  %107 = vperm.xlu0 %106, %v24
  %v108 = vpop.permute.xlu0 %107
  %v110 = vmul.f32 %v93, %v96
  %v111 = vmul.f32 %v92, %v100
  %v112 = vmul.f32 %v91, %v104
  %v113 = vmul.f32 %v90, %v108
  %v115 = vrot.slane %v11, 4
  %vm116 = vcmask 31744
  %v118 = vsel %vm116, %v110, 0
  %v121 = vsel %vm116, %v111, 0
  %v124 = vsel %vm116, %v112, 0
  %v127 = vsel %vm116, %v113, 0
  %vm129 = vcmask 1043456
  %v130 = vsel %vm129, %v115, 0
  %132 = vmatprep.subr.mxu0 0.0
  %133 = vmatpush1.msra.mxu0 %v130
  %134 = vmatprep.subr.mxu0 0.0
  %135 = vmatpush1.msra.mxu0 0.0
  %136 = vmatprep.subr.mxu0 0.0
  %137 = vmatpush1.msra.mxu0 0.0
  %138 = vmatprep.subr.mxu0 0.0
  %139 = vmatpush1.msra.mxu0 0.0
  %140 = vmatprep.subr.mxu0 0.0
  %141 = vmatpush1.msra.mxu0 0.0
  %142 = vmatprep.subr.mxu0 0.0
  %143 = vmatpush1.msra.mxu0 0.0
  %144 = vmatprep.subr.mxu0 0.0
  %145 = vmatpush1.msra.mxu0 0.0
  %146 = vmatprep.subr.mxu0 0.0
  %147 = vmatpush1.msra.mxu0 0.0
  %148 = vmatprep.subr.mxu0 0.0
  %149 = vmatpush1.msra.mxu0 0.0
  %150 = vmatprep.subr.mxu0 0.0
  %151 = vmatpush1.msra.mxu0 0.0
  %152 = vmatprep.subr.mxu0 0.0
  %153 = vmatpush1.msra.mxu0 0.0
  %154 = vmatprep.subr.mxu0 0.0
  %155 = vmatpush1.msra.mxu0 0.0
  %156 = vmatprep.subr.mxu0 0.0
  %157 = vmatpush1.msra.mxu0 0.0
  %158 = vmatprep.subr.mxu0 0.0
  %159 = vmatpush1.msra.mxu0 0.0
  %160 = vmatprep.subr.mxu0 0.0
  %161 = vmatpush1.msra.mxu0 0.0
  %162 = vmatprep.subr.mxu0 0.0
  %163 = vmatpush1.msra.mxu0 0.0
  %164 = vmatprep.subr.mxu0 0.0
  %165 = vmatpush1.msra.mxu0 0.0
  %166 = vmatprep.subr.mxu0 0.0
  %167 = vmatpush1.msra.mxu0 0.0
  %168 = vmatprep.subr.mxu0 0.0
  %169 = vmatpush1.msra.mxu0 0.0
  %170 = vmatprep.subr.mxu0 0.0
  %171 = vmatpush1.msra.mxu0 0.0
  %172 = vmatprep.subr.mxu0 0.0
  %173 = vmatpush1.msra.mxu0 0.0
  %174 = vmatprep.subr.mxu0 0.0
  %175 = vmatpush1.msra.mxu0 0.0
  %176 = vmatprep.subr.mxu0 0.0
  %177 = vmatpush1.msra.mxu0 0.0
  %178 = vmatprep.subr.mxu0 0.0
  %179 = vmatpush1.msra.mxu0 0.0
  %180 = vmatprep.subr.mxu0 0.0
  %181 = vmatpush1.msra.mxu0 0.0
  %182 = vmatprep.subr.mxu0 0.0
  %183 = vmatpush1.msra.mxu0 0.0
  %184 = vmatprep.subr.mxu0 0.0
  %185 = vmatpush1.msra.mxu0 0.0
  %186 = vmatprep.subr.mxu0 0.0
  %187 = vmatpush1.msra.mxu0 0.0
  %188 = vmatprep.subr.mxu0 0.0
  %189 = vmatpush1.msra.mxu0 0.0
  %190 = vmatprep.subr.mxu0 0.0
  %191 = vmatpush1.msra.mxu0 0.0
  %192 = vmatprep.subr.mxu0 0.0
  %193 = vmatpush1.msra.mxu0 0.0
  %194 = vmatprep.subr.mxu0 0.0
  %195 = vmatpush1.msra.mxu0 0.0
  %196 = vmatprep.mubr.f32.mxu0 0.0
  %197 = vmatmul.mubr.f32.gmra.mrb[0].mxu0 %v118
  %v198 = vpop.f32.mrb[0].mxu0
  %v199 = vadd.f32 0.0, %v198
  %v200 = vpop.f32.mrb[0].mxu0
  %201 = vmatprep.mubr.f32.mxu0 0.0
  %202 = vmatmul.mubr.f32.gmra.mrb[0].mxu0 %v121
  %v203 = vpop.f32.mrb[0].mxu0
  %v204 = vadd.f32 0.0, %v203
  %v205 = vpop.f32.mrb[0].mxu0
  %206 = vmatprep.mubr.f32.mxu0 0.0
  %207 = vmatmul.mubr.f32.gmra.mrb[0].mxu0 %v124
  %v208 = vpop.f32.mrb[0].mxu0
  %v209 = vadd.f32 0.0, %v208
  %v210 = vpop.f32.mrb[0].mxu0
  %211 = vmatprep.mubr.f32.mxu0 0.0
  %212 = vmatmul.mubr.f32.gmra.mrb[0].mxu0 %v127
  %v213 = vpop.f32.mrb[0].mxu0
  %v214 = vadd.f32 0.0, %v213
  %v215 = vpop.f32.mrb[0].mxu0
  %216 = vdwg.mxu0
  %v218 = vsel %vm116, %v81, 0
  %v221 = vsel %vm116, %v82, 0
  %v224 = vsel %vm116, %v83, 0
  %v227 = vsel %vm116, %v84, 0
  %v229 = vsel %vm129, %v11, 0
  %231 = vmatprep.subr.mxu0 0.0
  %232 = vmatpush1.msra.mxu0 %v229
  %233 = vmatprep.subr.mxu0 0.0
  %234 = vmatpush1.msra.mxu0 0.0
  %235 = vmatprep.subr.mxu0 0.0
  %236 = vmatpush1.msra.mxu0 0.0
  %237 = vmatprep.subr.mxu0 0.0
  %238 = vmatpush1.msra.mxu0 0.0
  %239 = vmatprep.subr.mxu0 0.0
  %240 = vmatpush1.msra.mxu0 0.0
  %241 = vmatprep.subr.mxu0 0.0
  %242 = vmatpush1.msra.mxu0 0.0
  %243 = vmatprep.subr.mxu0 0.0
  %244 = vmatpush1.msra.mxu0 0.0
  %245 = vmatprep.subr.mxu0 0.0
  %246 = vmatpush1.msra.mxu0 0.0
  %247 = vmatprep.subr.mxu0 0.0
  %248 = vmatpush1.msra.mxu0 0.0
  %249 = vmatprep.subr.mxu0 0.0
  %250 = vmatpush1.msra.mxu0 0.0
  %251 = vmatprep.subr.mxu0 0.0
  %252 = vmatpush1.msra.mxu0 0.0
  %253 = vmatprep.subr.mxu0 0.0
  %254 = vmatpush1.msra.mxu0 0.0
  %255 = vmatprep.subr.mxu0 0.0
  %256 = vmatpush1.msra.mxu0 0.0
  %257 = vmatprep.subr.mxu0 0.0
  %258 = vmatpush1.msra.mxu0 0.0
  %259 = vmatprep.subr.mxu0 0.0
  %260 = vmatpush1.msra.mxu0 0.0
  %261 = vmatprep.subr.mxu0 0.0
  %262 = vmatpush1.msra.mxu0 0.0
  %263 = vmatprep.subr.mxu0 0.0
  %264 = vmatpush1.msra.mxu0 0.0
  %265 = vmatprep.subr.mxu0 0.0
  %266 = vmatpush1.msra.mxu0 0.0
  %267 = vmatprep.subr.mxu0 0.0
  %268 = vmatpush1.msra.mxu0 0.0
  %269 = vmatprep.subr.mxu0 0.0
  %270 = vmatpush1.msra.mxu0 0.0
  %271 = vmatprep.subr.mxu0 0.0
  %272 = vmatpush1.msra.mxu0 0.0
  %273 = vmatprep.subr.mxu0 0.0
  %274 = vmatpush1.msra.mxu0 0.0
  %275 = vmatprep.subr.mxu0 0.0
  %276 = vmatpush1.msra.mxu0 0.0
  %277 = vmatprep.subr.mxu0 0.0
  %278 = vmatpush1.msra.mxu0 0.0
  %279 = vmatprep.subr.mxu0 0.0
  %280 = vmatpush1.msra.mxu0 0.0
  %281 = vmatprep.subr.mxu0 0.0
  %282 = vmatpush1.msra.mxu0 0.0
  %283 = vmatprep.subr.mxu0 0.0
  %284 = vmatpush1.msra.mxu0 0.0
  %285 = vmatprep.subr.mxu0 0.0
  %286 = vmatpush1.msra.mxu0 0.0
  %287 = vmatprep.subr.mxu0 0.0
  %288 = vmatpush1.msra.mxu0 0.0
  %289 = vmatprep.subr.mxu0 0.0
  %290 = vmatpush1.msra.mxu0 0.0
  %291 = vmatprep.subr.mxu0 0.0
  %292 = vmatpush1.msra.mxu0 0.0
  %293 = vmatprep.subr.mxu0 0.0
  %294 = vmatpush1.msra.mxu0 0.0
  %295 = vmatprep.mubr.f32.mxu0 0.0
  %296 = vmatmul.mubr.f32.gmra.mrb[0].mxu0 %v218
  %v297 = vpop.f32.mrb[0].mxu0
  %v298 = vadd.f32 %v199, %v297
  %v299 = vpop.f32.mrb[0].mxu0
  %300 = vmatprep.mubr.f32.mxu0 0.0
  %301 = vmatmul.mubr.f32.gmra.mrb[0].mxu0 %v221
  %v302 = vpop.f32.mrb[0].mxu0
  %v303 = vadd.f32 %v204, %v302
  %v304 = vpop.f32.mrb[0].mxu0
  %305 = vmatprep.mubr.f32.mxu0 0.0
  %306 = vmatmul.mubr.f32.gmra.mrb[0].mxu0 %v224
  %v307 = vpop.f32.mrb[0].mxu0
  %v308 = vadd.f32 %v209, %v307
  %v309 = vpop.f32.mrb[0].mxu0
  %310 = vmatprep.mubr.f32.mxu0 0.0
  %311 = vmatmul.mubr.f32.gmra.mrb[0].mxu0 %v227
  %v312 = vpop.f32.mrb[0].mxu0
  %v313 = vadd.f32 %v214, %v312
  %v314 = vpop.f32.mrb[0].mxu0
  %315 = vdwg.mxu0
  %316 = vset.pattern.permute.xlu0 2
  %317 = vperm.xlu0 %316, %v21
  %v318 = vpop.permute.xlu0 %317
  %320 = vset.pattern.permute.xlu0 2
  %321 = vperm.xlu0 %320, %v22
  %v322 = vpop.permute.xlu0 %321
  %324 = vset.pattern.permute.xlu0 2
  %325 = vperm.xlu0 %324, %v23
  %v326 = vpop.permute.xlu0 %325
  %328 = vset.pattern.permute.xlu0 2
  %329 = vperm.xlu0 %328, %v24
  %v330 = vpop.permute.xlu0 %329
  %v332 = vmul.f32 %v46, %v318
  %v333 = vmul.f32 %v47, %v322
  %v334 = vmul.f32 %v48, %v326
  %v335 = vmul.f32 %v49, %v330
  %v337 = vsel %vm116, %v332, 0
  %v340 = vsel %vm116, %v333, 0
  %v343 = vsel %vm116, %v334, 0
  %v346 = vsel %vm116, %v335, 0
  %v349 = vsel %vm129, %v12, 0
  %351 = vmatprep.subr.mxu0 0.0
  %352 = vmatpush1.msra.mxu0 %v349
  %353 = vmatprep.subr.mxu0 0.0
  %354 = vmatpush1.msra.mxu0 0.0
  %355 = vmatprep.subr.mxu0 0.0
  %356 = vmatpush1.msra.mxu0 0.0
  %357 = vmatprep.subr.mxu0 0.0
  %358 = vmatpush1.msra.mxu0 0.0
  %359 = vmatprep.subr.mxu0 0.0
  %360 = vmatpush1.msra.mxu0 0.0
  %361 = vmatprep.subr.mxu0 0.0
  %362 = vmatpush1.msra.mxu0 0.0
  %363 = vmatprep.subr.mxu0 0.0
  %364 = vmatpush1.msra.mxu0 0.0
  %365 = vmatprep.subr.mxu0 0.0
  %366 = vmatpush1.msra.mxu0 0.0
  %367 = vmatprep.subr.mxu0 0.0
  %368 = vmatpush1.msra.mxu0 0.0
  %369 = vmatprep.subr.mxu0 0.0
  %370 = vmatpush1.msra.mxu0 0.0
  %371 = vmatprep.subr.mxu0 0.0
  %372 = vmatpush1.msra.mxu0 0.0
  %373 = vmatprep.subr.mxu0 0.0
  %374 = vmatpush1.msra.mxu0 0.0
  %375 = vmatprep.subr.mxu0 0.0
  %376 = vmatpush1.msra.mxu0 0.0
  %377 = vmatprep.subr.mxu0 0.0
  %378 = vmatpush1.msra.mxu0 0.0
  %379 = vmatprep.subr.mxu0 0.0
  %380 = vmatpush1.msra.mxu0 0.0
  %381 = vmatprep.subr.mxu0 0.0
  %382 = vmatpush1.msra.mxu0 0.0
  %383 = vmatprep.subr.mxu0 0.0
  %384 = vmatpush1.msra.mxu0 0.0
  %385 = vmatprep.subr.mxu0 0.0
  %386 = vmatpush1.msra.mxu0 0.0
  %387 = vmatprep.subr.mxu0 0.0
  %388 = vmatpush1.msra.mxu0 0.0
  %389 = vmatprep.subr.mxu0 0.0
  %390 = vmatpush1.msra.mxu0 0.0
  %391 = vmatprep.subr.mxu0 0.0
  %392 = vmatpush1.msra.mxu0 0.0
  %393 = vmatprep.subr.mxu0 0.0
  %394 = vmatpush1.msra.mxu0 0.0
  %395 = vmatprep.subr.mxu0 0.0
  %396 = vmatpush1.msra.mxu0 0.0
  %397 = vmatprep.subr.mxu0 0.0
  %398 = vmatpush1.msra.mxu0 0.0
  %399 = vmatprep.subr.mxu0 0.0
  %400 = vmatpush1.msra.mxu0 0.0
  %401 = vmatprep.subr.mxu0 0.0
  %402 = vmatpush1.msra.mxu0 0.0
  %403 = vmatprep.subr.mxu0 0.0
  %404 = vmatpush1.msra.mxu0 0.0
  %405 = vmatprep.subr.mxu0 0.0
  %406 = vmatpush1.msra.mxu0 0.0
  %407 = vmatprep.subr.mxu0 0.0
  %408 = vmatpush1.msra.mxu0 0.0
  %409 = vmatprep.subr.mxu0 0.0
  %410 = vmatpush1.msra.mxu0 0.0
  %411 = vmatprep.subr.mxu0 0.0
  %412 = vmatpush1.msra.mxu0 0.0
  %413 = vmatprep.subr.mxu0 0.0
  %414 = vmatpush1.msra.mxu0 0.0
  %415 = vmatprep.mubr.f32.mxu0 0.0
  %416 = vmatmul.mubr.f32.gmra.mrb[0].mxu0 %v337
  %v417 = vpop.f32.mrb[0].mxu0
  %v418 = vadd.f32 0.0, %v417
  %v419 = vpop.f32.mrb[0].mxu0
  %420 = vmatprep.mubr.f32.mxu0 0.0
  %421 = vmatmul.mubr.f32.gmra.mrb[0].mxu0 %v340
  %v422 = vpop.f32.mrb[0].mxu0
  %v423 = vadd.f32 0.0, %v422
  %v424 = vpop.f32.mrb[0].mxu0
  %425 = vmatprep.mubr.f32.mxu0 0.0
  %426 = vmatmul.mubr.f32.gmra.mrb[0].mxu0 %v343
  %v427 = vpop.f32.mrb[0].mxu0
  %v428 = vadd.f32 0.0, %v427
  %v429 = vpop.f32.mrb[0].mxu0
  %430 = vmatprep.mubr.f32.mxu0 0.0
  %431 = vmatmul.mubr.f32.gmra.mrb[0].mxu0 %v346
  %v432 = vpop.f32.mrb[0].mxu0
  %v433 = vadd.f32 0.0, %v432
  %v434 = vpop.f32.mrb[0].mxu0
  %435 = vdwg.mxu0
  %v436 = vadd.f32 %v298, %v418
  %v437 = vadd.f32 %v303, %v423
  %v438 = vadd.f32 %v308, %v428
  %v439 = vadd.f32 %v313, %v433
  %v440 = vrot.slane %v46, 1
  %v441 = vrot.slane %v47, 1
  %v442 = vrot.slane %v48, 1
  %v443 = vrot.slane %v49, 1
  %vm444 = vcmp.lt.s32.totalorder %v55, 7
  %v445 = vsel %vm444, %v442, %v443
  %v446 = vsel %vm444, %v441, %v442
  %v447 = vsel %vm444, %v440, %v441
  %v448 = vsel %vm444, %v443, %v440
  %449 = vset.pattern.permute.xlu0 3
  %450 = vperm.xlu0 %449, %v21
  %v451 = vpop.permute.xlu0 %450
  %453 = vset.pattern.permute.xlu0 3
  %454 = vperm.xlu0 %453, %v22
  %v455 = vpop.permute.xlu0 %454
  %457 = vset.pattern.permute.xlu0 3
  %458 = vperm.xlu0 %457, %v23
  %v459 = vpop.permute.xlu0 %458
  %461 = vset.pattern.permute.xlu0 3
  %462 = vperm.xlu0 %461, %v24
  %v463 = vpop.permute.xlu0 %462
  %v465 = vmul.f32 %v447, %v451
  %v466 = vmul.f32 %v446, %v455
  %v467 = vmul.f32 %v445, %v459
  %v468 = vmul.f32 %v448, %v463
  %v469 = vrot.slane %v12, 4
  %v471 = vsel %vm116, %v465, 0
  %v474 = vsel %vm116, %v466, 0
  %v477 = vsel %vm116, %v467, 0
  %v480 = vsel %vm116, %v468, 0
  %v482 = vsel %vm129, %v469, 0
  %484 = vmatprep.subr.mxu0 0.0
  %485 = vmatpush1.msra.mxu0 %v482
  %486 = vmatprep.subr.mxu0 0.0
  %487 = vmatpush1.msra.mxu0 0.0
  %488 = vmatprep.subr.mxu0 0.0
  %489 = vmatpush1.msra.mxu0 0.0
  %490 = vmatprep.subr.mxu0 0.0
  %491 = vmatpush1.msra.mxu0 0.0
  %492 = vmatprep.subr.mxu0 0.0
  %493 = vmatpush1.msra.mxu0 0.0
  %494 = vmatprep.subr.mxu0 0.0
  %495 = vmatpush1.msra.mxu0 0.0
  %496 = vmatprep.subr.mxu0 0.0
  %497 = vmatpush1.msra.mxu0 0.0
  %498 = vmatprep.subr.mxu0 0.0
  %499 = vmatpush1.msra.mxu0 0.0
  %500 = vmatprep.subr.mxu0 0.0
  %501 = vmatpush1.msra.mxu0 0.0
  %502 = vmatprep.subr.mxu0 0.0
  %503 = vmatpush1.msra.mxu0 0.0
  %504 = vmatprep.subr.mxu0 0.0
  %505 = vmatpush1.msra.mxu0 0.0
  %506 = vmatprep.subr.mxu0 0.0
  %507 = vmatpush1.msra.mxu0 0.0
  %508 = vmatprep.subr.mxu0 0.0
  %509 = vmatpush1.msra.mxu0 0.0
  %510 = vmatprep.subr.mxu0 0.0
  %511 = vmatpush1.msra.mxu0 0.0
  %512 = vmatprep.subr.mxu0 0.0
  %513 = vmatpush1.msra.mxu0 0.0
  %514 = vmatprep.subr.mxu0 0.0
  %515 = vmatpush1.msra.mxu0 0.0
  %516 = vmatprep.subr.mxu0 0.0
  %517 = vmatpush1.msra.mxu0 0.0
  %518 = vmatprep.subr.mxu0 0.0
  %519 = vmatpush1.msra.mxu0 0.0
  %520 = vmatprep.subr.mxu0 0.0
  %521 = vmatpush1.msra.mxu0 0.0
  %522 = vmatprep.subr.mxu0 0.0
  %523 = vmatpush1.msra.mxu0 0.0
  %524 = vmatprep.subr.mxu0 0.0
  %525 = vmatpush1.msra.mxu0 0.0
  %526 = vmatprep.subr.mxu0 0.0
  %527 = vmatpush1.msra.mxu0 0.0
  %528 = vmatprep.subr.mxu0 0.0
  %529 = vmatpush1.msra.mxu0 0.0
  %530 = vmatprep.subr.mxu0 0.0
  %531 = vmatpush1.msra.mxu0 0.0
  %532 = vmatprep.subr.mxu0 0.0
  %533 = vmatpush1.msra.mxu0 0.0
  %534 = vmatprep.subr.mxu0 0.0
  %535 = vmatpush1.msra.mxu0 0.0
  %536 = vmatprep.subr.mxu0 0.0
  %537 = vmatpush1.msra.mxu0 0.0
  %538 = vmatprep.subr.mxu0 0.0
  %539 = vmatpush1.msra.mxu0 0.0
  %540 = vmatprep.subr.mxu0 0.0
  %541 = vmatpush1.msra.mxu0 0.0
  %542 = vmatprep.subr.mxu0 0.0
  %543 = vmatpush1.msra.mxu0 0.0
  %544 = vmatprep.subr.mxu0 0.0
  %545 = vmatpush1.msra.mxu0 0.0
  %546 = vmatprep.subr.mxu0 0.0
  %547 = vmatpush1.msra.mxu0 0.0
  %548 = vmatprep.mubr.f32.mxu0 0.0
  %549 = vmatmul.mubr.f32.gmra.mrb[0].mxu0 %v471
  %v550 = vpop.f32.mrb[0].mxu0
  %v551 = vadd.f32 0.0, %v550
  %v552 = vpop.f32.mrb[0].mxu0
  %553 = vmatprep.mubr.f32.mxu0 0.0
  %554 = vmatmul.mubr.f32.gmra.mrb[0].mxu0 %v474
  %v555 = vpop.f32.mrb[0].mxu0
  %v556 = vadd.f32 0.0, %v555
  %v557 = vpop.f32.mrb[0].mxu0
  %558 = vmatprep.mubr.f32.mxu0 0.0
  %559 = vmatmul.mubr.f32.gmra.mrb[0].mxu0 %v477
  %v560 = vpop.f32.mrb[0].mxu0
  %v561 = vadd.f32 0.0, %v560
  %v562 = vpop.f32.mrb[0].mxu0
  %563 = vmatprep.mubr.f32.mxu0 0.0
  %564 = vmatmul.mubr.f32.gmra.mrb[0].mxu0 %v480
  %v565 = vpop.f32.mrb[0].mxu0
  %v566 = vadd.f32 0.0, %v565
  %v567 = vpop.f32.mrb[0].mxu0
  %568 = vdwg.mxu0
  %v569 = vadd.f32 %v436, %v551
  %v570 = vadd.f32 %v437, %v556
  %v571 = vadd.f32 %v438, %v561
  %v572 = vadd.f32 %v439, %v566
  %v573 = vrot.slane %v46, 2
  %v574 = vrot.slane %v47, 2
  %v575 = vrot.slane %v48, 2
  %v576 = vrot.slane %v49, 2
  %vm577 = vcmp.lt.s32.totalorder %v55, 6
  %v578 = vsel %vm577, %v575, %v576
  %v579 = vsel %vm577, %v574, %v575
  %v580 = vsel %vm577, %v573, %v574
  %v581 = vsel %vm577, %v576, %v573
  %582 = vset.pattern.permute.xlu0 4
  %583 = vperm.xlu0 %582, %v21
  %v584 = vpop.permute.xlu0 %583
  %586 = vset.pattern.permute.xlu0 4
  %587 = vperm.xlu0 %586, %v22
  %v588 = vpop.permute.xlu0 %587
  %590 = vset.pattern.permute.xlu0 4
  %591 = vperm.xlu0 %590, %v23
  %v592 = vpop.permute.xlu0 %591
  %594 = vset.pattern.permute.xlu0 4
  %595 = vperm.xlu0 %594, %v24
  %v596 = vpop.permute.xlu0 %595
  %v598 = vmul.f32 %v580, %v584
  %v599 = vmul.f32 %v579, %v588
  %v600 = vmul.f32 %v578, %v592
  %v601 = vmul.f32 %v581, %v596
  %v603 = vsel %vm116, %v598, 0
  %v606 = vsel %vm116, %v599, 0
  %v609 = vsel %vm116, %v600, 0
  %v612 = vsel %vm116, %v601, 0
  %v615 = vsel %vm129, %v13, 0
  %617 = vmatprep.subr.mxu0 0.0
  %618 = vmatpush1.msra.mxu0 %v615
  %619 = vmatprep.subr.mxu0 0.0
  %620 = vmatpush1.msra.mxu0 0.0
  %621 = vmatprep.subr.mxu0 0.0
  %622 = vmatpush1.msra.mxu0 0.0
  %623 = vmatprep.subr.mxu0 0.0
  %624 = vmatpush1.msra.mxu0 0.0
  %625 = vmatprep.subr.mxu0 0.0
  %626 = vmatpush1.msra.mxu0 0.0
  %627 = vmatprep.subr.mxu0 0.0
  %628 = vmatpush1.msra.mxu0 0.0
  %629 = vmatprep.subr.mxu0 0.0
  %630 = vmatpush1.msra.mxu0 0.0
  %631 = vmatprep.subr.mxu0 0.0
  %632 = vmatpush1.msra.mxu0 0.0
  %633 = vmatprep.subr.mxu0 0.0
  %634 = vmatpush1.msra.mxu0 0.0
  %635 = vmatprep.subr.mxu0 0.0
  %636 = vmatpush1.msra.mxu0 0.0
  %637 = vmatprep.subr.mxu0 0.0
  %638 = vmatpush1.msra.mxu0 0.0
  %639 = vmatprep.subr.mxu0 0.0
  %640 = vmatpush1.msra.mxu0 0.0
  %641 = vmatprep.subr.mxu0 0.0
  %642 = vmatpush1.msra.mxu0 0.0
  %643 = vmatprep.subr.mxu0 0.0
  %644 = vmatpush1.msra.mxu0 0.0
  %645 = vmatprep.subr.mxu0 0.0
  %646 = vmatpush1.msra.mxu0 0.0
  %647 = vmatprep.subr.mxu0 0.0
  %648 = vmatpush1.msra.mxu0 0.0
  %649 = vmatprep.subr.mxu0 0.0
  %650 = vmatpush1.msra.mxu0 0.0
  %651 = vmatprep.subr.mxu0 0.0
  %652 = vmatpush1.msra.mxu0 0.0
  %653 = vmatprep.subr.mxu0 0.0
  %654 = vmatpush1.msra.mxu0 0.0
  %655 = vmatprep.subr.mxu0 0.0
  %656 = vmatpush1.msra.mxu0 0.0
  %657 = vmatprep.subr.mxu0 0.0
  %658 = vmatpush1.msra.mxu0 0.0
  %659 = vmatprep.subr.mxu0 0.0
  %660 = vmatpush1.msra.mxu0 0.0
  %661 = vmatprep.subr.mxu0 0.0
  %662 = vmatpush1.msra.mxu0 0.0
  %663 = vmatprep.subr.mxu0 0.0
  %664 = vmatpush1.msra.mxu0 0.0
  %665 = vmatprep.subr.mxu0 0.0
  %666 = vmatpush1.msra.mxu0 0.0
  %667 = vmatprep.subr.mxu0 0.0
  %668 = vmatpush1.msra.mxu0 0.0
  %669 = vmatprep.subr.mxu0 0.0
  %670 = vmatpush1.msra.mxu0 0.0
  %671 = vmatprep.subr.mxu0 0.0
  %672 = vmatpush1.msra.mxu0 0.0
  %673 = vmatprep.subr.mxu0 0.0
  %674 = vmatpush1.msra.mxu0 0.0
  %675 = vmatprep.subr.mxu0 0.0
  %676 = vmatpush1.msra.mxu0 0.0
  %677 = vmatprep.subr.mxu0 0.0
  %678 = vmatpush1.msra.mxu0 0.0
  %679 = vmatprep.subr.mxu0 0.0
  %680 = vmatpush1.msra.mxu0 0.0
  %681 = vmatprep.mubr.f32.mxu0 0.0
  %682 = vmatmul.mubr.f32.gmra.mrb[0].mxu0 %v603
  %v683 = vpop.f32.mrb[0].mxu0
  %v684 = vadd.f32 0.0, %v683
  %v685 = vpop.f32.mrb[0].mxu0
  %686 = vmatprep.mubr.f32.mxu0 0.0
  %687 = vmatmul.mubr.f32.gmra.mrb[0].mxu0 %v606
  %v688 = vpop.f32.mrb[0].mxu0
  %v689 = vadd.f32 0.0, %v688
  %v690 = vpop.f32.mrb[0].mxu0
  %691 = vmatprep.mubr.f32.mxu0 0.0
  %692 = vmatmul.mubr.f32.gmra.mrb[0].mxu0 %v609
  %v693 = vpop.f32.mrb[0].mxu0
  %v694 = vadd.f32 0.0, %v693
  %v695 = vpop.f32.mrb[0].mxu0
  %696 = vmatprep.mubr.f32.mxu0 0.0
  %697 = vmatmul.mubr.f32.gmra.mrb[0].mxu0 %v612
  %v698 = vpop.f32.mrb[0].mxu0
  %v699 = vadd.f32 0.0, %v698
  %v700 = vpop.f32.mrb[0].mxu0
  %701 = vdwg.mxu0
  %v702 = vadd.f32 %v569, %v684
  %v703 = vadd.f32 %v570, %v689
  %v704 = vadd.f32 %v571, %v694
  %v705 = vadd.f32 %v572, %v699
  %v706 = vlaneseq
  %v707 = vshrl.u32 %v706, 7
  %v708 = vsub.s32 0, %v707
  %v709 = vrot.slane %v20, %v708
  %v710 = vadd.f32 %v702, %v709
  %v711 = vadd.f32 %v703, %v709
  %v712 = vadd.f32 %v704, %v709
  %v713 = vadd.f32 %v705, %v709
  %vm714 = vcmask 64512
  %v715 = vsel %vm714, %v710, 0.0
  %v716 = vsel %vm714, %v711, 0.0
  %v717 = vadd.f32 %v715, %v716
  %v718 = vsel %vm714, %v712, 0.0
  %v719 = vadd.f32 %v717, %v718
  %v720 = vsel %vm714, %v713, 0.0
  %v721 = vadd.f32 %v719, %v720
  %v722 = vrot.slane %v721, 4
  %v723 = vadd.f32 %v721, %v722
  %v724 = vrot.slane %v723, 2
  %v725 = vadd.f32 %v723, %v724
  %v726 = vrot.slane %v725, 1
  %v727 = vadd.f32 %v725, %v726
  %v728 = vrcp.pop 32.0
  %v729 = vmul.f32 %v727, %v728
  %v730 = vsub.f32 %v710, %v729
  %v731 = vsub.f32 %v711, %v729
  %v732 = vsub.f32 %v712, %v729
  %v733 = vsub.f32 %v713, %v729
  %v734 = vmul.f32 %v730, %v730
  %v735 = vmul.f32 %v731, %v731
  %v736 = vmul.f32 %v732, %v732
  %v737 = vmul.f32 %v733, %v733
  %v738 = vsel %vm714, %v734, 0.0
  %v739 = vsel %vm714, %v735, 0.0
  %v740 = vadd.f32 %v738, %v739
  %v741 = vsel %vm714, %v736, 0.0
  %v742 = vadd.f32 %v740, %v741
  %v743 = vsel %vm714, %v737, 0.0
  %v744 = vadd.f32 %v742, %v743
  %v745 = vrot.slane %v744, 4
  %v746 = vadd.f32 %v744, %v745
  %v747 = vrot.slane %v746, 2
  %v748 = vadd.f32 %v746, %v747
  %v749 = vrot.slane %v748, 1
  %v750 = vadd.f32 %v748, %v749
  %v751 = vmul.f32 %v750, %v728
  %756 = vrot.lane.b32.xlu0 %v730, 8
  %v757 = vpop.permute.xlu0 %756
  %758 = vrot.lane.b32.xlu0 %v731, 8
  %v759 = vpop.permute.xlu0 %758
  %760 = vrot.lane.b32.xlu0 %v732, 8
  %v761 = vpop.permute.xlu0 %760
  %762 = vrot.lane.b32.xlu0 %v733, 8
  %v763 = vpop.permute.xlu0 %762
  %v768 = vmul.f32 %v709, %v757
  %v769 = vmul.f32 %v709, %v759
  %v770 = vmul.f32 %v709, %v761
  %v771 = vmul.f32 %v709, %v763
  %v772 = vadd.f32 %v751, 1e-05
  %v773 = vrsqrt.pop %v772
  %775 = vrot.lane.b32.xlu0 %v773, 8
  %v776 = vpop.permute.xlu0 %775
  %v778 = vmul.f32 %v768, %v776
  %v779 = vmul.f32 %v769, %v776
  %v780 = vmul.f32 %v770, %v776
  %v781 = vmul.f32 %v771, %v776
  %783 = vrot.lane.b32.xlu0 %v709, 120
  %v784 = vpop.permute.xlu0 %783
  %v786 = vadd.f32 %v778, %v784
  %v787 = vadd.f32 %v779, %v784
  %v788 = vadd.f32 %v780, %v784
  %v789 = vadd.f32 %v781, %v784
  %v790 = vxor.u32 %v786, 2147483648
  %v791 = vxor.u32 %v787, 2147483648
  %v792 = vxor.u32 %v788, 2147483648
  %v793 = vxor.u32 %v789, 2147483648
  %v794 = vmul.f32 %v790, 1.442695
  %v795 = vpow.pop %v794
  %v796 = vmul.f32 %v791, 1.442695
  %v797 = vpow.pop %v796
  %v798 = vmul.f32 %v792, 1.442695
  %v799 = vpow.pop %v798
  %v800 = vmul.f32 %v793, 1.442695
  %v801 = vpow.pop %v800
  %v802 = vadd.f32 %v795, 1.0
  %v803 = vadd.f32 %v797, 1.0
  %v804 = vadd.f32 %v799, 1.0
  %v805 = vadd.f32 %v801, 1.0
  %v806 = vrcp.pop %v802
  %v807 = vmul.f32 1.0, %v806
  %v808 = vrcp.pop %v803
  %v809 = vmul.f32 1.0, %v808
  %v810 = vrcp.pop %v804
  %v811 = vmul.f32 1.0, %v810
  %v812 = vrcp.pop %v805
  %v813 = vmul.f32 1.0, %v812
  %818 = vrot.lane.b32.xlu0 %v807, 120
  %v819 = vpop.permute.xlu0 %818
  %820 = vrot.lane.b32.xlu0 %v809, 120
  %v821 = vpop.permute.xlu0 %820
  %822 = vrot.lane.b32.xlu0 %v811, 120
  %v823 = vpop.permute.xlu0 %822
  %824 = vrot.lane.b32.xlu0 %v813, 120
  %v825 = vpop.permute.xlu0 %824
  %v830 = vrot.slane %v819, 7
  %v831 = vrot.slane %v821, 7
  %v832 = vrot.slane %v823, 7
  %v833 = vrot.slane %v825, 7
  %v834 = vsel %vm89, %v832, %v833
  %v835 = vsel %vm89, %v831, %v832
  %v836 = vsel %vm89, %v830, %v831
  %v837 = vsel %vm89, %v833, %v830
  %838 = vset.pattern.permute.xlu0 5
  %839 = vperm.xlu0 %838, %v21
  %v840 = vpop.permute.xlu0 %839
  %842 = vset.pattern.permute.xlu0 5
  %843 = vperm.xlu0 %842, %v22
  %v844 = vpop.permute.xlu0 %843
  %846 = vset.pattern.permute.xlu0 5
  %847 = vperm.xlu0 %846, %v23
  %v848 = vpop.permute.xlu0 %847
  %850 = vset.pattern.permute.xlu0 5
  %851 = vperm.xlu0 %850, %v24
  %v852 = vpop.permute.xlu0 %851
  %v854 = vmul.f32 %v837, %v840
  %v855 = vmul.f32 %v836, %v844
  %v856 = vmul.f32 %v835, %v848
  %v857 = vmul.f32 %v834, %v852
  %858 = vset.pattern.permute.xlu0 6
  %859 = vperm.xlu0 %858, %v21
  %v860 = vpop.permute.xlu0 %859
  %862 = vset.pattern.permute.xlu0 6
  %863 = vperm.xlu0 %862, %v22
  %v864 = vpop.permute.xlu0 %863
  %866 = vset.pattern.permute.xlu0 6
  %867 = vperm.xlu0 %866, %v23
  %v868 = vpop.permute.xlu0 %867
  %870 = vset.pattern.permute.xlu0 6
  %871 = vperm.xlu0 %870, %v24
  %v872 = vpop.permute.xlu0 %871
  %v874 = vmul.f32 %v807, %v860
  %v875 = vmul.f32 %v809, %v864
  %v876 = vmul.f32 %v811, %v868
  %v877 = vmul.f32 %v813, %v872
  %882 = vrot.lane.b32.xlu0 %v874, 120
  %v883 = vpop.permute.xlu0 %882
  %884 = vrot.lane.b32.xlu0 %v875, 120
  %v885 = vpop.permute.xlu0 %884
  %886 = vrot.lane.b32.xlu0 %v876, 120
  %v887 = vpop.permute.xlu0 %886
  %888 = vrot.lane.b32.xlu0 %v877, 120
  %v889 = vpop.permute.xlu0 %888
  %v890 = vsel %vm714, %v883, 0
  %v892 = vsel %vm714, %v885, 0
  %v894 = vsel %vm714, %v887, 0
  %v896 = vsel %vm714, %v889, 0
  %898 = vmatprep.subr.mxu0 0.0
  %899 = vmatpush1.msra.mxu0 %v15
  %900 = vmatprep.subr.mxu0 0.0
  %901 = vmatpush1.msra.mxu0 0.0
  %902 = vmatprep.subr.mxu0 0.0
  %903 = vmatpush1.msra.mxu0 0.0
  %904 = vmatprep.subr.mxu0 0.0
  %905 = vmatpush1.msra.mxu0 0.0
  %906 = vmatprep.subr.mxu0 0.0
  %907 = vmatpush1.msra.mxu0 0.0
  %908 = vmatprep.subr.mxu0 0.0
  %909 = vmatpush1.msra.mxu0 0.0
  %910 = vmatprep.subr.mxu0 0.0
  %911 = vmatpush1.msra.mxu0 0.0
  %912 = vmatprep.subr.mxu0 0.0
  %913 = vmatpush1.msra.mxu0 0.0
  %914 = vmatprep.subr.mxu0 0.0
  %915 = vmatpush1.msra.mxu0 0.0
  %916 = vmatprep.subr.mxu0 0.0
  %917 = vmatpush1.msra.mxu0 0.0
  %918 = vmatprep.subr.mxu0 0.0
  %919 = vmatpush1.msra.mxu0 0.0
  %920 = vmatprep.subr.mxu0 0.0
  %921 = vmatpush1.msra.mxu0 0.0
  %922 = vmatprep.subr.mxu0 0.0
  %923 = vmatpush1.msra.mxu0 0.0
  %924 = vmatprep.subr.mxu0 0.0
  %925 = vmatpush1.msra.mxu0 0.0
  %926 = vmatprep.subr.mxu0 0.0
  %927 = vmatpush1.msra.mxu0 0.0
  %928 = vmatprep.subr.mxu0 0.0
  %929 = vmatpush1.msra.mxu0 0.0
  %930 = vmatprep.subr.mxu0 0.0
  %931 = vmatpush1.msra.mxu0 0.0
  %932 = vmatprep.subr.mxu0 0.0
  %933 = vmatpush1.msra.mxu0 0.0
  %934 = vmatprep.subr.mxu0 0.0
  %935 = vmatpush1.msra.mxu0 0.0
  %936 = vmatprep.subr.mxu0 0.0
  %937 = vmatpush1.msra.mxu0 0.0
  %938 = vmatprep.subr.mxu0 0.0
  %939 = vmatpush1.msra.mxu0 0.0
  %940 = vmatprep.subr.mxu0 0.0
  %941 = vmatpush1.msra.mxu0 0.0
  %942 = vmatprep.subr.mxu0 0.0
  %943 = vmatpush1.msra.mxu0 0.0
  %944 = vmatprep.subr.mxu0 0.0
  %945 = vmatpush1.msra.mxu0 0.0
  %946 = vmatprep.subr.mxu0 0.0
  %947 = vmatpush1.msra.mxu0 0.0
  %948 = vmatprep.subr.mxu0 0.0
  %949 = vmatpush1.msra.mxu0 0.0
  %950 = vmatprep.subr.mxu0 0.0
  %951 = vmatpush1.msra.mxu0 0.0
  %952 = vmatprep.subr.mxu0 0.0
  %953 = vmatpush1.msra.mxu0 0.0
  %954 = vmatprep.subr.mxu0 0.0
  %955 = vmatpush1.msra.mxu0 0.0
  %956 = vmatprep.subr.mxu0 0.0
  %957 = vmatpush1.msra.mxu0 0.0
  %958 = vmatprep.subr.mxu0 0.0
  %959 = vmatpush1.msra.mxu0 0.0
  %960 = vmatprep.subr.mxu0 0.0
  %961 = vmatpush1.msra.mxu0 0.0
  %962 = vmatprep.mubr.f32.mxu0 0.0
  %963 = vmatmul.mubr.f32.gmra.mrb[0].mxu0 %v890
  %v964 = vpop.f32.mrb[0].mxu0
  %v965 = vadd.f32 0.0, %v964
  %v966 = vpop.f32.mrb[0].mxu0
  %967 = vmatprep.mubr.f32.mxu0 0.0
  %968 = vmatmul.mubr.f32.gmra.mrb[0].mxu0 %v892
  %v969 = vpop.f32.mrb[0].mxu0
  %v970 = vadd.f32 0.0, %v969
  %v971 = vpop.f32.mrb[0].mxu0
  %972 = vmatprep.mubr.f32.mxu0 0.0
  %973 = vmatmul.mubr.f32.gmra.mrb[0].mxu0 %v894
  %v974 = vpop.f32.mrb[0].mxu0
  %v975 = vadd.f32 0.0, %v974
  %v976 = vpop.f32.mrb[0].mxu0
  %977 = vmatprep.mubr.f32.mxu0 0.0
  %978 = vmatmul.mubr.f32.gmra.mrb[0].mxu0 %v896
  %v979 = vpop.f32.mrb[0].mxu0
  %v980 = vadd.f32 0.0, %v979
  %v981 = vpop.f32.mrb[0].mxu0
  %982 = vdwg.mxu0
  %v984 = vsel %vm714, %v854, 0
  %v987 = vsel %vm714, %v855, 0
  %v990 = vsel %vm714, %v856, 0
  %v993 = vsel %vm714, %v857, 0
  %995 = vmatprep.subr.mxu0 0.0
  %996 = vmatpush1.msra.mxu0 %v14
  %997 = vmatprep.subr.mxu0 0.0
  %998 = vmatpush1.msra.mxu0 0.0
  %999 = vmatprep.subr.mxu0 0.0
  %1000 = vmatpush1.msra.mxu0 0.0
  %1001 = vmatprep.subr.mxu0 0.0
  %1002 = vmatpush1.msra.mxu0 0.0
  %1003 = vmatprep.subr.mxu0 0.0
  %1004 = vmatpush1.msra.mxu0 0.0
  %1005 = vmatprep.subr.mxu0 0.0
  %1006 = vmatpush1.msra.mxu0 0.0
  %1007 = vmatprep.subr.mxu0 0.0
  %1008 = vmatpush1.msra.mxu0 0.0
  %1009 = vmatprep.subr.mxu0 0.0
  %1010 = vmatpush1.msra.mxu0 0.0
  %1011 = vmatprep.subr.mxu0 0.0
  %1012 = vmatpush1.msra.mxu0 0.0
  %1013 = vmatprep.subr.mxu0 0.0
  %1014 = vmatpush1.msra.mxu0 0.0
  %1015 = vmatprep.subr.mxu0 0.0
  %1016 = vmatpush1.msra.mxu0 0.0
  %1017 = vmatprep.subr.mxu0 0.0
  %1018 = vmatpush1.msra.mxu0 0.0
  %1019 = vmatprep.subr.mxu0 0.0
  %1020 = vmatpush1.msra.mxu0 0.0
  %1021 = vmatprep.subr.mxu0 0.0
  %1022 = vmatpush1.msra.mxu0 0.0
  %1023 = vmatprep.subr.mxu0 0.0
  %1024 = vmatpush1.msra.mxu0 0.0
  %1025 = vmatprep.subr.mxu0 0.0
  %1026 = vmatpush1.msra.mxu0 0.0
  %1027 = vmatprep.subr.mxu0 0.0
  %1028 = vmatpush1.msra.mxu0 0.0
  %1029 = vmatprep.subr.mxu0 0.0
  %1030 = vmatpush1.msra.mxu0 0.0
  %1031 = vmatprep.subr.mxu0 0.0
  %1032 = vmatpush1.msra.mxu0 0.0
  %1033 = vmatprep.subr.mxu0 0.0
  %1034 = vmatpush1.msra.mxu0 0.0
  %1035 = vmatprep.subr.mxu0 0.0
  %1036 = vmatpush1.msra.mxu0 0.0
  %1037 = vmatprep.subr.mxu0 0.0
  %1038 = vmatpush1.msra.mxu0 0.0
  %1039 = vmatprep.subr.mxu0 0.0
  %1040 = vmatpush1.msra.mxu0 0.0
  %1041 = vmatprep.subr.mxu0 0.0
  %1042 = vmatpush1.msra.mxu0 0.0
  %1043 = vmatprep.subr.mxu0 0.0
  %1044 = vmatpush1.msra.mxu0 0.0
  %1045 = vmatprep.subr.mxu0 0.0
  %1046 = vmatpush1.msra.mxu0 0.0
  %1047 = vmatprep.subr.mxu0 0.0
  %1048 = vmatpush1.msra.mxu0 0.0
  %1049 = vmatprep.subr.mxu0 0.0
  %1050 = vmatpush1.msra.mxu0 0.0
  %1051 = vmatprep.subr.mxu0 0.0
  %1052 = vmatpush1.msra.mxu0 0.0
  %1053 = vmatprep.subr.mxu0 0.0
  %1054 = vmatpush1.msra.mxu0 0.0
  %1055 = vmatprep.subr.mxu0 0.0
  %1056 = vmatpush1.msra.mxu0 0.0
  %1057 = vmatprep.subr.mxu0 0.0
  %1058 = vmatpush1.msra.mxu0 0.0
  %1059 = vmatprep.mubr.f32.mxu0 0.0
  %1060 = vmatmul.mubr.f32.gmra.mrb[0].mxu0 %v984
  %v1061 = vpop.f32.mrb[0].mxu0
  %v1062 = vadd.f32 %v965, %v1061
  %v1063 = vpop.f32.mrb[0].mxu0
  %1064 = vmatprep.mubr.f32.mxu0 0.0
  %1065 = vmatmul.mubr.f32.gmra.mrb[0].mxu0 %v987
  %v1066 = vpop.f32.mrb[0].mxu0
  %v1067 = vadd.f32 %v970, %v1066
  %v1068 = vpop.f32.mrb[0].mxu0
  %1069 = vmatprep.mubr.f32.mxu0 0.0
  %1070 = vmatmul.mubr.f32.gmra.mrb[0].mxu0 %v990
  %v1071 = vpop.f32.mrb[0].mxu0
  %v1072 = vadd.f32 %v975, %v1071
  %v1073 = vpop.f32.mrb[0].mxu0
  %1074 = vmatprep.mubr.f32.mxu0 0.0
  %1075 = vmatmul.mubr.f32.gmra.mrb[0].mxu0 %v993
  %v1076 = vpop.f32.mrb[0].mxu0
  %v1077 = vadd.f32 %v980, %v1076
  %v1078 = vpop.f32.mrb[0].mxu0
  %1079 = vdwg.mxu0
  %v1080 = vrot.slane %v819, 1
  %v1081 = vrot.slane %v821, 1
  %v1082 = vrot.slane %v823, 1
  %v1083 = vrot.slane %v825, 1
  %v1084 = vsel %vm444, %v1082, %v1083
  %v1085 = vsel %vm444, %v1081, %v1082
  %v1086 = vsel %vm444, %v1080, %v1081
  %v1087 = vsel %vm444, %v1083, %v1080
  %1088 = vset.pattern.permute.xlu0 7
  %1089 = vperm.xlu0 %1088, %v21
  %v1090 = vpop.permute.xlu0 %1089
  %1092 = vset.pattern.permute.xlu0 7
  %1093 = vperm.xlu0 %1092, %v22
  %v1094 = vpop.permute.xlu0 %1093
  %1096 = vset.pattern.permute.xlu0 7
  %1097 = vperm.xlu0 %1096, %v23
  %v1098 = vpop.permute.xlu0 %1097
  %1100 = vset.pattern.permute.xlu0 7
  %1101 = vperm.xlu0 %1100, %v24
  %v1102 = vpop.permute.xlu0 %1101
  %v1104 = vmul.f32 %v1086, %v1090
  %v1105 = vmul.f32 %v1085, %v1094
  %v1106 = vmul.f32 %v1084, %v1098
  %v1107 = vmul.f32 %v1087, %v1102
  %v1109 = vsel %vm714, %v1104, 0
  %v1112 = vsel %vm714, %v1105, 0
  %v1115 = vsel %vm714, %v1106, 0
  %v1118 = vsel %vm714, %v1107, 0
  %1120 = vmatprep.subr.mxu0 0.0
  %1121 = vmatpush1.msra.mxu0 %v16
  %1122 = vmatprep.subr.mxu0 0.0
  %1123 = vmatpush1.msra.mxu0 0.0
  %1124 = vmatprep.subr.mxu0 0.0
  %1125 = vmatpush1.msra.mxu0 0.0
  %1126 = vmatprep.subr.mxu0 0.0
  %1127 = vmatpush1.msra.mxu0 0.0
  %1128 = vmatprep.subr.mxu0 0.0
  %1129 = vmatpush1.msra.mxu0 0.0
  %1130 = vmatprep.subr.mxu0 0.0
  %1131 = vmatpush1.msra.mxu0 0.0
  %1132 = vmatprep.subr.mxu0 0.0
  %1133 = vmatpush1.msra.mxu0 0.0
  %1134 = vmatprep.subr.mxu0 0.0
  %1135 = vmatpush1.msra.mxu0 0.0
  %1136 = vmatprep.subr.mxu0 0.0
  %1137 = vmatpush1.msra.mxu0 0.0
  %1138 = vmatprep.subr.mxu0 0.0
  %1139 = vmatpush1.msra.mxu0 0.0
  %1140 = vmatprep.subr.mxu0 0.0
  %1141 = vmatpush1.msra.mxu0 0.0
  %1142 = vmatprep.subr.mxu0 0.0
  %1143 = vmatpush1.msra.mxu0 0.0
  %1144 = vmatprep.subr.mxu0 0.0
  %1145 = vmatpush1.msra.mxu0 0.0
  %1146 = vmatprep.subr.mxu0 0.0
  %1147 = vmatpush1.msra.mxu0 0.0
  %1148 = vmatprep.subr.mxu0 0.0
  %1149 = vmatpush1.msra.mxu0 0.0
  %1150 = vmatprep.subr.mxu0 0.0
  %1151 = vmatpush1.msra.mxu0 0.0
  %1152 = vmatprep.subr.mxu0 0.0
  %1153 = vmatpush1.msra.mxu0 0.0
  %1154 = vmatprep.subr.mxu0 0.0
  %1155 = vmatpush1.msra.mxu0 0.0
  %1156 = vmatprep.subr.mxu0 0.0
  %1157 = vmatpush1.msra.mxu0 0.0
  %1158 = vmatprep.subr.mxu0 0.0
  %1159 = vmatpush1.msra.mxu0 0.0
  %1160 = vmatprep.subr.mxu0 0.0
  %1161 = vmatpush1.msra.mxu0 0.0
  %1162 = vmatprep.subr.mxu0 0.0
  %1163 = vmatpush1.msra.mxu0 0.0
  %1164 = vmatprep.subr.mxu0 0.0
  %1165 = vmatpush1.msra.mxu0 0.0
  %1166 = vmatprep.subr.mxu0 0.0
  %1167 = vmatpush1.msra.mxu0 0.0
  %1168 = vmatprep.subr.mxu0 0.0
  %1169 = vmatpush1.msra.mxu0 0.0
  %1170 = vmatprep.subr.mxu0 0.0
  %1171 = vmatpush1.msra.mxu0 0.0
  %1172 = vmatprep.subr.mxu0 0.0
  %1173 = vmatpush1.msra.mxu0 0.0
  %1174 = vmatprep.subr.mxu0 0.0
  %1175 = vmatpush1.msra.mxu0 0.0
  %1176 = vmatprep.subr.mxu0 0.0
  %1177 = vmatpush1.msra.mxu0 0.0
  %1178 = vmatprep.subr.mxu0 0.0
  %1179 = vmatpush1.msra.mxu0 0.0
  %1180 = vmatprep.subr.mxu0 0.0
  %1181 = vmatpush1.msra.mxu0 0.0
  %1182 = vmatprep.subr.mxu0 0.0
  %1183 = vmatpush1.msra.mxu0 0.0
  %1184 = vmatprep.mubr.f32.mxu0 0.0
  %1185 = vmatmul.mubr.f32.gmra.mrb[0].mxu0 %v1109
  %v1186 = vpop.f32.mrb[0].mxu0
  %v1187 = vadd.f32 0.0, %v1186
  %v1188 = vpop.f32.mrb[0].mxu0
  %1189 = vmatprep.mubr.f32.mxu0 0.0
  %1190 = vmatmul.mubr.f32.gmra.mrb[0].mxu0 %v1112
  %v1191 = vpop.f32.mrb[0].mxu0
  %v1192 = vadd.f32 0.0, %v1191
  %v1193 = vpop.f32.mrb[0].mxu0
  %1194 = vmatprep.mubr.f32.mxu0 0.0
  %1195 = vmatmul.mubr.f32.gmra.mrb[0].mxu0 %v1115
  %v1196 = vpop.f32.mrb[0].mxu0
  %v1197 = vadd.f32 0.0, %v1196
  %v1198 = vpop.f32.mrb[0].mxu0
  %1199 = vmatprep.mubr.f32.mxu0 0.0
  %1200 = vmatmul.mubr.f32.gmra.mrb[0].mxu0 %v1118
  %v1201 = vpop.f32.mrb[0].mxu0
  %v1202 = vadd.f32 0.0, %v1201
  %v1203 = vpop.f32.mrb[0].mxu0
  %1204 = vdwg.mxu0
  %v1205 = vadd.f32 %v1062, %v1187
  %v1206 = vadd.f32 %v1067, %v1192
  %v1207 = vadd.f32 %v1072, %v1197
  %v1208 = vadd.f32 %v1077, %v1202
  %1209 = vrot.lane.b32.xlu0 %v709, 104
  %v1210 = vpop.permute.xlu0 %1209
  %v1212 = vadd.f32 %v1205, %v1210
  %v1213 = vadd.f32 %v1206, %v1210
  %v1214 = vadd.f32 %v1207, %v1210
  %v1215 = vadd.f32 %v1208, %v1210
  %v1216 = vsel %vm116, %v1212, 0.0
  %v1217 = vsel %vm116, %v1213, 0.0
  %v1218 = vadd.f32 %v1216, %v1217
  %v1219 = vsel %vm116, %v1214, 0.0
  %v1220 = vadd.f32 %v1218, %v1219
  %v1221 = vsel %vm116, %v1215, 0.0
  %v1222 = vadd.f32 %v1220, %v1221
  %v1223 = vrot.slane %v1222, 4
  %v1224 = vadd.f32 %v1222, %v1223
  %v1225 = vrot.slane %v1224, 2
  %v1226 = vadd.f32 %v1224, %v1225
  %v1227 = vrot.slane %v1226, 1
  %v1228 = vadd.f32 %v1226, %v1227
  %v1229 = vmul.f32 %v1228, %v728
  %v1230 = vsub.f32 %v1212, %v1229
  %v1231 = vsub.f32 %v1213, %v1229
  %v1232 = vsub.f32 %v1214, %v1229
  %v1233 = vsub.f32 %v1215, %v1229
  %v1234 = vmul.f32 %v1230, %v1230
  %v1235 = vmul.f32 %v1231, %v1231
  %v1236 = vmul.f32 %v1232, %v1232
  %v1237 = vmul.f32 %v1233, %v1233
  %v1238 = vsel %vm116, %v1234, 0.0
  %v1239 = vsel %vm116, %v1235, 0.0
  %v1240 = vadd.f32 %v1238, %v1239
  %v1241 = vsel %vm116, %v1236, 0.0
  %v1242 = vadd.f32 %v1240, %v1241
  %v1243 = vsel %vm116, %v1237, 0.0
  %v1244 = vadd.f32 %v1242, %v1243
  %v1245 = vrot.slane %v1244, 4
  %v1246 = vadd.f32 %v1244, %v1245
  %v1247 = vrot.slane %v1246, 2
  %v1248 = vadd.f32 %v1246, %v1247
  %v1249 = vrot.slane %v1248, 1
  %v1250 = vadd.f32 %v1248, %v1249
  %v1251 = vmul.f32 %v1250, %v728
  %1256 = vrot.lane.b32.xlu0 %v1230, 28
  %v1257 = vpop.permute.xlu0 %1256
  %1258 = vrot.lane.b32.xlu0 %v1231, 28
  %v1259 = vpop.permute.xlu0 %1258
  %1260 = vrot.lane.b32.xlu0 %v1232, 28
  %v1261 = vpop.permute.xlu0 %1260
  %1262 = vrot.lane.b32.xlu0 %v1233, 28
  %v1263 = vpop.permute.xlu0 %1262
  %v1268 = vmul.f32 %v709, %v1257
  %v1269 = vmul.f32 %v709, %v1259
  %v1270 = vmul.f32 %v709, %v1261
  %v1271 = vmul.f32 %v709, %v1263
  %v1272 = vadd.f32 %v1251, 1e-05
  %v1273 = vrsqrt.pop %v1272
  %1275 = vrot.lane.b32.xlu0 %v1273, 28
  %v1276 = vpop.permute.xlu0 %1275
  %v1278 = vmul.f32 %v1268, %v1276
  %v1279 = vmul.f32 %v1269, %v1276
  %v1280 = vmul.f32 %v1270, %v1276
  %v1281 = vmul.f32 %v1271, %v1276
  %1282 = vrot.lane.b32.xlu0 %v709, 124
  %v1283 = vpop.permute.xlu0 %1282
  %v1285 = vadd.f32 %v1278, %v1283
  %v1286 = vadd.f32 %v1279, %v1283
  %v1287 = vadd.f32 %v1280, %v1283
  %v1288 = vadd.f32 %v1281, %v1283
  %1293 = vrot.lane.b32.xlu0 %v1285, 100
  %v1294 = vpop.permute.xlu0 %1293
  %1295 = vrot.lane.b32.xlu0 %v1286, 100
  %v1296 = vpop.permute.xlu0 %1295
  %1297 = vrot.lane.b32.xlu0 %v1287, 100
  %v1298 = vpop.permute.xlu0 %1297
  %1299 = vrot.lane.b32.xlu0 %v1288, 100
  %v1300 = vpop.permute.xlu0 %1299
  %1301 = vrot.lane.b32.xlu0 %v709, 92
  %v1302 = vpop.permute.xlu0 %1301
  %v1304 = vsel %vm116, %v1294, 0
  %v1306 = vsel %vm116, %v1296, 0
  %v1308 = vsel %vm116, %v1298, 0
  %v1310 = vsel %vm116, %v1300, 0
  %v1313 = vsel %vm129, %v17, 0
  %1315 = vmatprep.subr.mxu0 0.0
  %1316 = vmatpush1.msra.mxu0 %v1313
  %1317 = vmatprep.subr.mxu0 0.0
  %1318 = vmatpush1.msra.mxu0 0.0
  %1319 = vmatprep.subr.mxu0 0.0
  %1320 = vmatpush1.msra.mxu0 0.0
  %1321 = vmatprep.subr.mxu0 0.0
  %1322 = vmatpush1.msra.mxu0 0.0
  %1323 = vmatprep.subr.mxu0 0.0
  %1324 = vmatpush1.msra.mxu0 0.0
  %1325 = vmatprep.subr.mxu0 0.0
  %1326 = vmatpush1.msra.mxu0 0.0
  %1327 = vmatprep.subr.mxu0 0.0
  %1328 = vmatpush1.msra.mxu0 0.0
  %1329 = vmatprep.subr.mxu0 0.0
  %1330 = vmatpush1.msra.mxu0 0.0
  %1331 = vmatprep.subr.mxu0 0.0
  %1332 = vmatpush1.msra.mxu0 0.0
  %1333 = vmatprep.subr.mxu0 0.0
  %1334 = vmatpush1.msra.mxu0 0.0
  %1335 = vmatprep.subr.mxu0 0.0
  %1336 = vmatpush1.msra.mxu0 0.0
  %1337 = vmatprep.subr.mxu0 0.0
  %1338 = vmatpush1.msra.mxu0 0.0
  %1339 = vmatprep.subr.mxu0 0.0
  %1340 = vmatpush1.msra.mxu0 0.0
  %1341 = vmatprep.subr.mxu0 0.0
  %1342 = vmatpush1.msra.mxu0 0.0
  %1343 = vmatprep.subr.mxu0 0.0
  %1344 = vmatpush1.msra.mxu0 0.0
  %1345 = vmatprep.subr.mxu0 0.0
  %1346 = vmatpush1.msra.mxu0 0.0
  %1347 = vmatprep.subr.mxu0 0.0
  %1348 = vmatpush1.msra.mxu0 0.0
  %1349 = vmatprep.subr.mxu0 0.0
  %1350 = vmatpush1.msra.mxu0 0.0
  %1351 = vmatprep.subr.mxu0 0.0
  %1352 = vmatpush1.msra.mxu0 0.0
  %1353 = vmatprep.subr.mxu0 0.0
  %1354 = vmatpush1.msra.mxu0 0.0
  %1355 = vmatprep.subr.mxu0 0.0
  %1356 = vmatpush1.msra.mxu0 0.0
  %1357 = vmatprep.subr.mxu0 0.0
  %1358 = vmatpush1.msra.mxu0 0.0
  %1359 = vmatprep.subr.mxu0 0.0
  %1360 = vmatpush1.msra.mxu0 0.0
  %1361 = vmatprep.subr.mxu0 0.0
  %1362 = vmatpush1.msra.mxu0 0.0
  %1363 = vmatprep.subr.mxu0 0.0
  %1364 = vmatpush1.msra.mxu0 0.0
  %1365 = vmatprep.subr.mxu0 0.0
  %1366 = vmatpush1.msra.mxu0 0.0
  %1367 = vmatprep.subr.mxu0 0.0
  %1368 = vmatpush1.msra.mxu0 0.0
  %1369 = vmatprep.subr.mxu0 0.0
  %1370 = vmatpush1.msra.mxu0 0.0
  %1371 = vmatprep.subr.mxu0 0.0
  %1372 = vmatpush1.msra.mxu0 0.0
  %1373 = vmatprep.subr.mxu0 0.0
  %1374 = vmatpush1.msra.mxu0 0.0
  %1375 = vmatprep.subr.mxu0 0.0
  %1376 = vmatpush1.msra.mxu0 0.0
  %1377 = vmatprep.subr.mxu0 0.0
  %1378 = vmatpush1.msra.mxu0 0.0
  %1379 = vmatprep.mubr.f32.mxu0 0.0
  %1380 = vmatmul.mubr.f32.gmra.mrb[0].mxu0 %v1304
  %v1381 = vpop.f32.mrb[0].mxu0
  %v1382 = vadd.f32 %v1302, %v1381
  %v1383 = vpop.f32.mrb[0].mxu0
  %1384 = vmatprep.mubr.f32.mxu0 0.0
  %1385 = vmatmul.mubr.f32.gmra.mrb[0].mxu0 %v1306
  %v1386 = vpop.f32.mrb[0].mxu0
  %v1387 = vadd.f32 %v1302, %v1386
  %v1388 = vpop.f32.mrb[0].mxu0
  %1389 = vmatprep.mubr.f32.mxu0 0.0
  %1390 = vmatmul.mubr.f32.gmra.mrb[0].mxu0 %v1308
  %v1391 = vpop.f32.mrb[0].mxu0
  %v1392 = vadd.f32 %v1302, %v1391
  %v1393 = vpop.f32.mrb[0].mxu0
  %1394 = vmatprep.mubr.f32.mxu0 0.0
  %1395 = vmatmul.mubr.f32.gmra.mrb[0].mxu0 %v1310
  %v1396 = vpop.f32.mrb[0].mxu0
  %v1397 = vadd.f32 %v1302, %v1396
  %v1398 = vpop.f32.mrb[0].mxu0
  %1399 = vdwg.mxu0
  %1404 = vrot.lane.b32.xlu0 %v1382, 124
  %v1405 = vpop.permute.xlu0 %1404
  %1406 = vrot.lane.b32.xlu0 %v1387, 124
  %v1407 = vpop.permute.xlu0 %1406
  %1408 = vrot.lane.b32.xlu0 %v1392, 124
  %v1409 = vpop.permute.xlu0 %1408
  %1410 = vrot.lane.b32.xlu0 %v1397, 124
  %v1411 = vpop.permute.xlu0 %1410
  %1416 = vxpose.xlu0.b32.start [1/16] %v1405, 128
  %1417 = vxpose.xlu0.b32.cont [2/16] %v1407, 128
  %1418 = vxpose.xlu0.b32.cont [3/16] %v1409, 128
  %1419 = vxpose.xlu0.b32.cont [4/16] %v1411, 128
  %1420 = vxpose.xlu0.b32.cont [5/16] 0.0, 128
  %1421 = vxpose.xlu0.b32.cont [6/16] 0.0, 128
  %1422 = vxpose.xlu0.b32.cont [7/16] 0.0, 128
  %1423 = vxpose.xlu0.b32.cont [8/16] 0.0, 128
  %1424 = vxpose.xlu0.b32.cont [9/16] 0.0, 128
  %1425 = vxpose.xlu0.b32.cont [10/16] 0.0, 128
  %1426 = vxpose.xlu0.b32.cont [11/16] 0.0, 128
  %1427 = vxpose.xlu0.b32.cont [12/16] 0.0, 128
  %1428 = vxpose.xlu0.b32.cont [13/16] 0.0, 128
  %1429 = vxpose.xlu0.b32.cont [14/16] 0.0, 128
  %1430 = vxpose.xlu0.b32.cont [15/16] 0.0, 128
  %1431 = vxpose.xlu0.b32.end [16/16] 0.0, 128
  %v1432 = vpop.trf.xlu0
  %v1433 = vpop.trf.xlu0
  %v1434 = vpop.trf.xlu0
  %v1435 = vpop.trf.xlu0
  %v1436 = vpop.trf.xlu0
  %v1437 = vpop.trf.xlu0
  %v1438 = vpop.trf.xlu0
  %v1439 = vpop.trf.xlu0
  %v1440 = vpop.trf.xlu0
  %v1441 = vpop.trf.xlu0
  %v1442 = vpop.trf.xlu0
  %v1443 = vpop.trf.xlu0
  %v1444 = vpop.trf.xlu0
  %v1445 = vpop.trf.xlu0
  %v1446 = vpop.trf.xlu0
  %v1447 = vpop.trf.xlu0
  %1449 = vrot.lane.b32.xlu0 %v1432, 32
  %v1450 = vpop.permute.xlu0 %1449
  %1452 = vrot.lane.b32.xlu0 %v1432, 64
  %v1453 = vpop.permute.xlu0 %1452
  %1455 = vrot.lane.b32.xlu0 %v1432, 96
  %v1456 = vpop.permute.xlu0 %1455
  %vm1458 = vcmask 261120
  %v1459 = vsel %vm1458, %v1432, %v1450
  %vm1460 = vcmask 523264
  %v1461 = vsel %vm1460, %v1459, %v1453
  %vm1462 = vcmask 785408
  %v1463 = vsel %vm1462, %v1461, %v1456
  %v1464 = vmul.f32 %v29, %v1463
  %v1465 = vsel %vm116, %v1382, 0
  %v1467 = vsel %vm116, %v1387, 0
  %v1469 = vsel %vm116, %v1392, 0
  %v1471 = vsel %vm116, %v1397, 0
  %v1474 = vsel %vm129, %v1464, 0
  %1476 = vmatprep.subr.mxu0 0.0
  %1477 = vmatpush1.msra.mxu0 %v1474
  %1478 = vmatprep.subr.mxu0 0.0
  %1479 = vmatpush1.msra.mxu0 0.0
  %1480 = vmatprep.subr.mxu0 0.0
  %1481 = vmatpush1.msra.mxu0 0.0
  %1482 = vmatprep.subr.mxu0 0.0
  %1483 = vmatpush1.msra.mxu0 0.0
  %1484 = vmatprep.subr.mxu0 0.0
  %1485 = vmatpush1.msra.mxu0 0.0
  %1486 = vmatprep.subr.mxu0 0.0
  %1487 = vmatpush1.msra.mxu0 0.0
  %1488 = vmatprep.subr.mxu0 0.0
  %1489 = vmatpush1.msra.mxu0 0.0
  %1490 = vmatprep.subr.mxu0 0.0
  %1491 = vmatpush1.msra.mxu0 0.0
  %1492 = vmatprep.subr.mxu0 0.0
  %1493 = vmatpush1.msra.mxu0 0.0
  %1494 = vmatprep.subr.mxu0 0.0
  %1495 = vmatpush1.msra.mxu0 0.0
  %1496 = vmatprep.subr.mxu0 0.0
  %1497 = vmatpush1.msra.mxu0 0.0
  %1498 = vmatprep.subr.mxu0 0.0
  %1499 = vmatpush1.msra.mxu0 0.0
  %1500 = vmatprep.subr.mxu0 0.0
  %1501 = vmatpush1.msra.mxu0 0.0
  %1502 = vmatprep.subr.mxu0 0.0
  %1503 = vmatpush1.msra.mxu0 0.0
  %1504 = vmatprep.subr.mxu0 0.0
  %1505 = vmatpush1.msra.mxu0 0.0
  %1506 = vmatprep.subr.mxu0 0.0
  %1507 = vmatpush1.msra.mxu0 0.0
  %1508 = vmatprep.subr.mxu0 0.0
  %1509 = vmatpush1.msra.mxu0 0.0
  %1510 = vmatprep.subr.mxu0 0.0
  %1511 = vmatpush1.msra.mxu0 0.0
  %1512 = vmatprep.subr.mxu0 0.0
  %1513 = vmatpush1.msra.mxu0 0.0
  %1514 = vmatprep.subr.mxu0 0.0
  %1515 = vmatpush1.msra.mxu0 0.0
  %1516 = vmatprep.subr.mxu0 0.0
  %1517 = vmatpush1.msra.mxu0 0.0
  %1518 = vmatprep.subr.mxu0 0.0
  %1519 = vmatpush1.msra.mxu0 0.0
  %1520 = vmatprep.subr.mxu0 0.0
  %1521 = vmatpush1.msra.mxu0 0.0
  %1522 = vmatprep.subr.mxu0 0.0
  %1523 = vmatpush1.msra.mxu0 0.0
  %1524 = vmatprep.subr.mxu0 0.0
  %1525 = vmatpush1.msra.mxu0 0.0
  %1526 = vmatprep.subr.mxu0 0.0
  %1527 = vmatpush1.msra.mxu0 0.0
  %1528 = vmatprep.subr.mxu0 0.0
  %1529 = vmatpush1.msra.mxu0 0.0
  %1530 = vmatprep.subr.mxu0 0.0
  %1531 = vmatpush1.msra.mxu0 0.0
  %1532 = vmatprep.subr.mxu0 0.0
  %1533 = vmatpush1.msra.mxu0 0.0
  %1534 = vmatprep.subr.mxu0 0.0
  %1535 = vmatpush1.msra.mxu0 0.0
  %1536 = vmatprep.subr.mxu0 0.0
  %1537 = vmatpush1.msra.mxu0 0.0
  %1538 = vmatprep.subr.mxu0 0.0
  %1539 = vmatpush1.msra.mxu0 0.0
  %1540 = vmatprep.mubr.f32.mxu0 0.0
  %1541 = vmatmul.mubr.f32.gmra.mrb[0].mxu0 %v1465
  %v1542 = vpop.f32.mrb[0].mxu0
  %v1543 = vadd.f32 %v25, %v1542
  %v1544 = vpop.f32.mrb[0].mxu0
  %1545 = vmatprep.mubr.f32.mxu0 0.0
  %1546 = vmatmul.mubr.f32.gmra.mrb[0].mxu0 %v1467
  %v1547 = vpop.f32.mrb[0].mxu0
  %v1548 = vadd.f32 %v26, %v1547
  %v1549 = vpop.f32.mrb[0].mxu0
  %1550 = vmatprep.mubr.f32.mxu0 0.0
  %1551 = vmatmul.mubr.f32.gmra.mrb[0].mxu0 %v1469
  %v1552 = vpop.f32.mrb[0].mxu0
  %v1553 = vadd.f32 %v27, %v1552
  %v1554 = vpop.f32.mrb[0].mxu0
  %1555 = vmatprep.mubr.f32.mxu0 0.0
  %1556 = vmatmul.mubr.f32.gmra.mrb[0].mxu0 %v1471
  %v1557 = vpop.f32.mrb[0].mxu0
  %v1558 = vadd.f32 %v28, %v1557
  %v1559 = vpop.f32.mrb[0].mxu0
  %1560 = vdwg.mxu0
  %1561 = vmax.xlane.f32.xlu0 %v1543
  %v1562 = vpop.xlane.xlu0 %1561
  %1563 = vmax.xlane.f32.xlu0 %v1548
  %v1564 = vpop.xlane.xlu0 %1563
  %1565 = vmax.xlane.f32.xlu0 %v1553
  %v1566 = vpop.xlane.xlu0 %1565
  %1567 = vmax.xlane.f32.xlu0 %v1558
  %v1568 = vpop.xlane.xlu0 %1567
  %v1569 = vsub.f32 %v1543, %v1562
  %v1570 = vsub.f32 %v1548, %v1564
  %v1571 = vsub.f32 %v1553, %v1566
  %v1572 = vsub.f32 %v1558, %v1568
  %v1573 = vmul.f32 %v1569, 1.442695
  %v1574 = vpow.pop %v1573
  %v1575 = vmul.f32 %v1570, 1.442695
  %v1576 = vpow.pop %v1575
  %v1577 = vmul.f32 %v1571, 1.442695
  %v1578 = vpow.pop %v1577
  %v1579 = vmul.f32 %v1572, 1.442695
  %v1580 = vpow.pop %v1579
  %1581 = vmatprep.subr.mxu0 0.0
  %1582 = vmatpush1.msra.mxu0 %v30
  %1583 = vmatprep.subr.mxu0 0.0
  %1584 = vmatpush1.msra.mxu0 %v31
  %1585 = vmatprep.subr.mxu0 0.0
  %1586 = vmatpush1.msra.mxu0 %v32
  %1587 = vmatprep.subr.mxu0 0.0
  %1588 = vmatpush1.msra.mxu0 %v33
  %1589 = vmatprep.subr.mxu0 0.0
  %1590 = vmatpush1.msra.mxu0 %v34
  %1591 = vmatprep.subr.mxu0 0.0
  %1592 = vmatpush1.msra.mxu0 %v35
  %1593 = vmatprep.subr.mxu0 0.0
  %1594 = vmatpush1.msra.mxu0 %v36
  %1595 = vmatprep.subr.mxu0 0.0
  %1596 = vmatpush1.msra.mxu0 %v37
  %1597 = vmatprep.subr.mxu0 0.0
  %1598 = vmatpush1.msra.mxu0 %v38
  %1599 = vmatprep.subr.mxu0 0.0
  %1600 = vmatpush1.msra.mxu0 %v39
  %1601 = vmatprep.subr.mxu0 0.0
  %1602 = vmatpush1.msra.mxu0 %v40
  %1603 = vmatprep.subr.mxu0 0.0
  %1604 = vmatpush1.msra.mxu0 %v41
  %1605 = vmatprep.subr.mxu0 0.0
  %1606 = vmatpush1.msra.mxu0 %v42
  %1607 = vmatprep.subr.mxu0 0.0
  %1608 = vmatpush1.msra.mxu0 %v43
  %1609 = vmatprep.subr.mxu0 0.0
  %1610 = vmatpush1.msra.mxu0 %v44
  %1611 = vmatprep.subr.mxu0 0.0
  %1612 = vmatpush1.msra.mxu0 %v45
  %1613 = vmatprep.subr.mxu0 0.0
  %1614 = vmatpush1.msra.mxu0 0.0
  %1615 = vmatprep.subr.mxu0 0.0
  %1616 = vmatpush1.msra.mxu0 0.0
  %1617 = vmatprep.subr.mxu0 0.0
  %1618 = vmatpush1.msra.mxu0 0.0
  %1619 = vmatprep.subr.mxu0 0.0
  %1620 = vmatpush1.msra.mxu0 0.0
  %1621 = vmatprep.subr.mxu0 0.0
  %1622 = vmatpush1.msra.mxu0 0.0
  %1623 = vmatprep.subr.mxu0 0.0
  %1624 = vmatpush1.msra.mxu0 0.0
  %1625 = vmatprep.subr.mxu0 0.0
  %1626 = vmatpush1.msra.mxu0 0.0
  %1627 = vmatprep.subr.mxu0 0.0
  %1628 = vmatpush1.msra.mxu0 0.0
  %1629 = vmatprep.subr.mxu0 0.0
  %1630 = vmatpush1.msra.mxu0 0.0
  %1631 = vmatprep.subr.mxu0 0.0
  %1632 = vmatpush1.msra.mxu0 0.0
  %1633 = vmatprep.subr.mxu0 0.0
  %1634 = vmatpush1.msra.mxu0 0.0
  %1635 = vmatprep.subr.mxu0 0.0
  %1636 = vmatpush1.msra.mxu0 0.0
  %1637 = vmatprep.subr.mxu0 0.0
  %1638 = vmatpush1.msra.mxu0 0.0
  %1639 = vmatprep.subr.mxu0 0.0
  %1640 = vmatpush1.msra.mxu0 0.0
  %1641 = vmatprep.subr.mxu0 0.0
  %1642 = vmatpush1.msra.mxu0 0.0
  %1643 = vmatprep.subr.mxu0 0.0
  %1644 = vmatpush1.msra.mxu0 0.0
  %1645 = vmatprep.mubr.f32.mxu0 0.0
  %1646 = vmatmul.mubr.f32.gmra.mrb[0].mxu0 %v1574
  %v1647 = vpop.f32.mrb[0].mxu0
  %v1648 = vadd.f32 0.0, %v1647
  %v1649 = vpop.f32.mrb[0].mxu0
  %1650 = vmatprep.mubr.f32.mxu0 0.0
  %1651 = vmatmul.mubr.f32.gmra.mrb[0].mxu0 %v1576
  %v1652 = vpop.f32.mrb[0].mxu0
  %v1653 = vadd.f32 0.0, %v1652
  %v1654 = vpop.f32.mrb[0].mxu0
  %1655 = vmatprep.mubr.f32.mxu0 0.0
  %1656 = vmatmul.mubr.f32.gmra.mrb[0].mxu0 %v1578
  %v1657 = vpop.f32.mrb[0].mxu0
  %v1658 = vadd.f32 0.0, %v1657
  %v1659 = vpop.f32.mrb[0].mxu0
  %1660 = vmatprep.mubr.f32.mxu0 0.0
  %1661 = vmatmul.mubr.f32.gmra.mrb[0].mxu0 %v1580
  %v1662 = vpop.f32.mrb[0].mxu0
  %v1663 = vadd.f32 0.0, %v1662
  %v1664 = vpop.f32.mrb[0].mxu0
  %1665 = vdwg.mxu0
  %v1667 = vsel %vm116, %v1648, 0
  %v1670 = vsel %vm116, %v1653, 0
  %v1673 = vsel %vm116, %v1658, 0
  %v1676 = vsel %vm116, %v1663, 0
  %v1679 = vsel %vm129, %v29, 0
  %1681 = vmatprep.subr.mxu0 0.0
  %1682 = vmatpush1.msra.mxu0 %v1679
  %1683 = vmatprep.subr.mxu0 0.0
  %1684 = vmatpush1.msra.mxu0 0.0
  %1685 = vmatprep.subr.mxu0 0.0
  %1686 = vmatpush1.msra.mxu0 0.0
  %1687 = vmatprep.subr.mxu0 0.0
  %1688 = vmatpush1.msra.mxu0 0.0
  %1689 = vmatprep.subr.mxu0 0.0
  %1690 = vmatpush1.msra.mxu0 0.0
  %1691 = vmatprep.subr.mxu0 0.0
  %1692 = vmatpush1.msra.mxu0 0.0
  %1693 = vmatprep.subr.mxu0 0.0
  %1694 = vmatpush1.msra.mxu0 0.0
  %1695 = vmatprep.subr.mxu0 0.0
  %1696 = vmatpush1.msra.mxu0 0.0
  %1697 = vmatprep.subr.mxu0 0.0
  %1698 = vmatpush1.msra.mxu0 0.0
  %1699 = vmatprep.subr.mxu0 0.0
  %1700 = vmatpush1.msra.mxu0 0.0
  %1701 = vmatprep.subr.mxu0 0.0
  %1702 = vmatpush1.msra.mxu0 0.0
  %1703 = vmatprep.subr.mxu0 0.0
  %1704 = vmatpush1.msra.mxu0 0.0
  %1705 = vmatprep.subr.mxu0 0.0
  %1706 = vmatpush1.msra.mxu0 0.0
  %1707 = vmatprep.subr.mxu0 0.0
  %1708 = vmatpush1.msra.mxu0 0.0
  %1709 = vmatprep.subr.mxu0 0.0
  %1710 = vmatpush1.msra.mxu0 0.0
  %1711 = vmatprep.subr.mxu0 0.0
  %1712 = vmatpush1.msra.mxu0 0.0
  %1713 = vmatprep.subr.mxu0 0.0
  %1714 = vmatpush1.msra.mxu0 0.0
  %1715 = vmatprep.subr.mxu0 0.0
  %1716 = vmatpush1.msra.mxu0 0.0
  %1717 = vmatprep.subr.mxu0 0.0
  %1718 = vmatpush1.msra.mxu0 0.0
  %1719 = vmatprep.subr.mxu0 0.0
  %1720 = vmatpush1.msra.mxu0 0.0
  %1721 = vmatprep.subr.mxu0 0.0
  %1722 = vmatpush1.msra.mxu0 0.0
  %1723 = vmatprep.subr.mxu0 0.0
  %1724 = vmatpush1.msra.mxu0 0.0
  %1725 = vmatprep.subr.mxu0 0.0
  %1726 = vmatpush1.msra.mxu0 0.0
  %1727 = vmatprep.subr.mxu0 0.0
  %1728 = vmatpush1.msra.mxu0 0.0
  %1729 = vmatprep.subr.mxu0 0.0
  %1730 = vmatpush1.msra.mxu0 0.0
  %1731 = vmatprep.subr.mxu0 0.0
  %1732 = vmatpush1.msra.mxu0 0.0
  %1733 = vmatprep.subr.mxu0 0.0
  %1734 = vmatpush1.msra.mxu0 0.0
  %1735 = vmatprep.subr.mxu0 0.0
  %1736 = vmatpush1.msra.mxu0 0.0
  %1737 = vmatprep.subr.mxu0 0.0
  %1738 = vmatpush1.msra.mxu0 0.0
  %1739 = vmatprep.subr.mxu0 0.0
  %1740 = vmatpush1.msra.mxu0 0.0
  %1741 = vmatprep.subr.mxu0 0.0
  %1742 = vmatpush1.msra.mxu0 0.0
  %1743 = vmatprep.subr.mxu0 0.0
  %1744 = vmatpush1.msra.mxu0 0.0
  %1745 = vmatprep.mubr.f32.mxu0 0.0
  %1746 = vmatmul.mubr.f32.gmra.mrb[0].mxu0 %v1667
  %v1747 = vpop.f32.mrb[0].mxu0
  %v1748 = vadd.f32 0.0, %v1747
  %v1749 = vpop.f32.mrb[0].mxu0
  %1750 = vmatprep.mubr.f32.mxu0 0.0
  %1751 = vmatmul.mubr.f32.gmra.mrb[0].mxu0 %v1670
  %v1752 = vpop.f32.mrb[0].mxu0
  %v1753 = vadd.f32 0.0, %v1752
  %v1754 = vpop.f32.mrb[0].mxu0
  %1755 = vmatprep.mubr.f32.mxu0 0.0
  %1756 = vmatmul.mubr.f32.gmra.mrb[0].mxu0 %v1673
  %v1757 = vpop.f32.mrb[0].mxu0
  %v1758 = vadd.f32 0.0, %v1757
  %v1759 = vpop.f32.mrb[0].mxu0
  %1760 = vmatprep.mubr.f32.mxu0 0.0
  %1761 = vmatmul.mubr.f32.gmra.mrb[0].mxu0 %v1676
  %v1762 = vpop.f32.mrb[0].mxu0
  %v1763 = vadd.f32 0.0, %v1762
  %v1764 = vpop.f32.mrb[0].mxu0
  %1765 = vdwg.mxu0
  %v1766 = vrcp.pop %v1748
  %v1767 = vrcp.pop %v1753
  %v1768 = vrcp.pop %v1758
  %v1769 = vrcp.pop %v1763
  %v1770 = vmul.f32 %v1574, %v1766
  %v1771 = vmul.f32 %v1576, %v1767
  %v1772 = vmul.f32 %v1578, %v1768
  %v1773 = vmul.f32 %v1580, %v1769
  %1774 = vrot.lane.b32.xlu0 %v1382, 120
  %v1775 = vpop.permute.xlu0 %1774
  %1776 = vrot.lane.b32.xlu0 %v1387, 120
  %v1777 = vpop.permute.xlu0 %1776
  %1778 = vrot.lane.b32.xlu0 %v1392, 120
  %v1779 = vpop.permute.xlu0 %1778
  %1780 = vrot.lane.b32.xlu0 %v1397, 120
  %v1781 = vpop.permute.xlu0 %1780
  %v1786 = vmul.f32 %v30, %v1775
  %v1787 = vmul.f32 %v31, %v1777
  %v1788 = vmul.f32 %v32, %v1779
  %v1789 = vmul.f32 %v33, %v1781
  %v1790 = vmul.f32 %v34, %v1775
  %v1791 = vmul.f32 %v35, %v1777
  %v1792 = vmul.f32 %v36, %v1779
  %v1793 = vmul.f32 %v37, %v1781
  %v1794 = vmul.f32 %v38, %v1775
  %v1795 = vmul.f32 %v39, %v1777
  %v1796 = vmul.f32 %v40, %v1779
  %v1797 = vmul.f32 %v41, %v1781
  %v1798 = vmul.f32 %v42, %v1775
  %v1799 = vmul.f32 %v43, %v1777
  %v1800 = vmul.f32 %v44, %v1779
  %v1801 = vmul.f32 %v45, %v1781
  %1802 = vmatprep.subr.mxu0 0.0
  %1803 = vmatpush1.msra.mxu0 %v1786
  %1804 = vmatprep.subr.mxu0 0.0
  %1805 = vmatpush1.msra.mxu0 %v1787
  %1806 = vmatprep.subr.mxu0 0.0
  %1807 = vmatpush1.msra.mxu0 %v1788
  %1808 = vmatprep.subr.mxu0 0.0
  %1809 = vmatpush1.msra.mxu0 %v1789
  %1810 = vmatprep.subr.mxu0 0.0
  %1811 = vmatpush1.msra.mxu0 %v1790
  %1812 = vmatprep.subr.mxu0 0.0
  %1813 = vmatpush1.msra.mxu0 %v1791
  %1814 = vmatprep.subr.mxu0 0.0
  %1815 = vmatpush1.msra.mxu0 %v1792
  %1816 = vmatprep.subr.mxu0 0.0
  %1817 = vmatpush1.msra.mxu0 %v1793
  %1818 = vmatprep.subr.mxu0 0.0
  %1819 = vmatpush1.msra.mxu0 %v1794
  %1820 = vmatprep.subr.mxu0 0.0
  %1821 = vmatpush1.msra.mxu0 %v1795
  %1822 = vmatprep.subr.mxu0 0.0
  %1823 = vmatpush1.msra.mxu0 %v1796
  %1824 = vmatprep.subr.mxu0 0.0
  %1825 = vmatpush1.msra.mxu0 %v1797
  %1826 = vmatprep.subr.mxu0 0.0
  %1827 = vmatpush1.msra.mxu0 %v1798
  %1828 = vmatprep.subr.mxu0 0.0
  %1829 = vmatpush1.msra.mxu0 %v1799
  %1830 = vmatprep.subr.mxu0 0.0
  %1831 = vmatpush1.msra.mxu0 %v1800
  %1832 = vmatprep.subr.mxu0 0.0
  %1833 = vmatpush1.msra.mxu0 %v1801
  %1834 = vmatprep.subr.mxu0 0.0
  %1835 = vmatpush1.msra.mxu0 0.0
  %1836 = vmatprep.subr.mxu0 0.0
  %1837 = vmatpush1.msra.mxu0 0.0
  %1838 = vmatprep.subr.mxu0 0.0
  %1839 = vmatpush1.msra.mxu0 0.0
  %1840 = vmatprep.subr.mxu0 0.0
  %1841 = vmatpush1.msra.mxu0 0.0
  %1842 = vmatprep.subr.mxu0 0.0
  %1843 = vmatpush1.msra.mxu0 0.0
  %1844 = vmatprep.subr.mxu0 0.0
  %1845 = vmatpush1.msra.mxu0 0.0
  %1846 = vmatprep.subr.mxu0 0.0
  %1847 = vmatpush1.msra.mxu0 0.0
  %1848 = vmatprep.subr.mxu0 0.0
  %1849 = vmatpush1.msra.mxu0 0.0
  %1850 = vmatprep.subr.mxu0 0.0
  %1851 = vmatpush1.msra.mxu0 0.0
  %1852 = vmatprep.subr.mxu0 0.0
  %1853 = vmatpush1.msra.mxu0 0.0
  %1854 = vmatprep.subr.mxu0 0.0
  %1855 = vmatpush1.msra.mxu0 0.0
  %1856 = vmatprep.subr.mxu0 0.0
  %1857 = vmatpush1.msra.mxu0 0.0
  %1858 = vmatprep.subr.mxu0 0.0
  %1859 = vmatpush1.msra.mxu0 0.0
  %1860 = vmatprep.subr.mxu0 0.0
  %1861 = vmatpush1.msra.mxu0 0.0
  %1862 = vmatprep.subr.mxu0 0.0
  %1863 = vmatpush1.msra.mxu0 0.0
  %1864 = vmatprep.subr.mxu0 0.0
  %1865 = vmatpush1.msra.mxu0 0.0
  %1866 = vmatprep.mubr.f32.mxu0 0.0
  %1867 = vmatmul.mubr.f32.gmra.mrb[0].mxu0 %v1770
  %v1868 = vpop.f32.mrb[0].mxu0
  %v1869 = vadd.f32 0.0, %v1868
  %v1870 = vpop.f32.mrb[0].mxu0
  %1871 = vmatprep.mubr.f32.mxu0 0.0
  %1872 = vmatmul.mubr.f32.gmra.mrb[0].mxu0 %v1771
  %v1873 = vpop.f32.mrb[0].mxu0
  %v1874 = vadd.f32 0.0, %v1873
  %v1875 = vpop.f32.mrb[0].mxu0
  %1876 = vmatprep.mubr.f32.mxu0 0.0
  %1877 = vmatmul.mubr.f32.gmra.mrb[0].mxu0 %v1772
  %v1878 = vpop.f32.mrb[0].mxu0
  %v1879 = vadd.f32 0.0, %v1878
  %v1880 = vpop.f32.mrb[0].mxu0
  %1881 = vmatprep.mubr.f32.mxu0 0.0
  %1882 = vmatmul.mubr.f32.gmra.mrb[0].mxu0 %v1773
  %v1883 = vpop.f32.mrb[0].mxu0
  %v1884 = vadd.f32 0.0, %v1883
  %v1885 = vpop.f32.mrb[0].mxu0
  %1886 = vdwg.mxu0
  %1887 = vrot.lane.b32.xlu0 %v709, 80
  %v1888 = vpop.permute.xlu0 %1887
  %v1891 = vsel %vm116, %v1869, 0
  %v1894 = vsel %vm116, %v1874, 0
  %v1897 = vsel %vm116, %v1879, 0
  %v1900 = vsel %vm116, %v1884, 0
  %v1903 = vsel %vm129, %v18, 0
  %1905 = vmatprep.subr.mxu0 0.0
  %1906 = vmatpush1.msra.mxu0 %v1903
  %1907 = vmatprep.subr.mxu0 0.0
  %1908 = vmatpush1.msra.mxu0 0.0
  %1909 = vmatprep.subr.mxu0 0.0
  %1910 = vmatpush1.msra.mxu0 0.0
  %1911 = vmatprep.subr.mxu0 0.0
  %1912 = vmatpush1.msra.mxu0 0.0
  %1913 = vmatprep.subr.mxu0 0.0
  %1914 = vmatpush1.msra.mxu0 0.0
  %1915 = vmatprep.subr.mxu0 0.0
  %1916 = vmatpush1.msra.mxu0 0.0
  %1917 = vmatprep.subr.mxu0 0.0
  %1918 = vmatpush1.msra.mxu0 0.0
  %1919 = vmatprep.subr.mxu0 0.0
  %1920 = vmatpush1.msra.mxu0 0.0
  %1921 = vmatprep.subr.mxu0 0.0
  %1922 = vmatpush1.msra.mxu0 0.0
  %1923 = vmatprep.subr.mxu0 0.0
  %1924 = vmatpush1.msra.mxu0 0.0
  %1925 = vmatprep.subr.mxu0 0.0
  %1926 = vmatpush1.msra.mxu0 0.0
  %1927 = vmatprep.subr.mxu0 0.0
  %1928 = vmatpush1.msra.mxu0 0.0
  %1929 = vmatprep.subr.mxu0 0.0
  %1930 = vmatpush1.msra.mxu0 0.0
  %1931 = vmatprep.subr.mxu0 0.0
  %1932 = vmatpush1.msra.mxu0 0.0
  %1933 = vmatprep.subr.mxu0 0.0
  %1934 = vmatpush1.msra.mxu0 0.0
  %1935 = vmatprep.subr.mxu0 0.0
  %1936 = vmatpush1.msra.mxu0 0.0
  %1937 = vmatprep.subr.mxu0 0.0
  %1938 = vmatpush1.msra.mxu0 0.0
  %1939 = vmatprep.subr.mxu0 0.0
  %1940 = vmatpush1.msra.mxu0 0.0
  %1941 = vmatprep.subr.mxu0 0.0
  %1942 = vmatpush1.msra.mxu0 0.0
  %1943 = vmatprep.subr.mxu0 0.0
  %1944 = vmatpush1.msra.mxu0 0.0
  %1945 = vmatprep.subr.mxu0 0.0
  %1946 = vmatpush1.msra.mxu0 0.0
  %1947 = vmatprep.subr.mxu0 0.0
  %1948 = vmatpush1.msra.mxu0 0.0
  %1949 = vmatprep.subr.mxu0 0.0
  %1950 = vmatpush1.msra.mxu0 0.0
  %1951 = vmatprep.subr.mxu0 0.0
  %1952 = vmatpush1.msra.mxu0 0.0
  %1953 = vmatprep.subr.mxu0 0.0
  %1954 = vmatpush1.msra.mxu0 0.0
  %1955 = vmatprep.subr.mxu0 0.0
  %1956 = vmatpush1.msra.mxu0 0.0
  %1957 = vmatprep.subr.mxu0 0.0
  %1958 = vmatpush1.msra.mxu0 0.0
  %1959 = vmatprep.subr.mxu0 0.0
  %1960 = vmatpush1.msra.mxu0 0.0
  %1961 = vmatprep.subr.mxu0 0.0
  %1962 = vmatpush1.msra.mxu0 0.0
  %1963 = vmatprep.subr.mxu0 0.0
  %1964 = vmatpush1.msra.mxu0 0.0
  %1965 = vmatprep.subr.mxu0 0.0
  %1966 = vmatpush1.msra.mxu0 0.0
  %1967 = vmatprep.subr.mxu0 0.0
  %1968 = vmatpush1.msra.mxu0 0.0
  %1969 = vmatprep.mubr.f32.mxu0 0.0
  %1970 = vmatmul.mubr.f32.gmra.mrb[0].mxu0 %v1891
  %v1971 = vpop.f32.mrb[0].mxu0
  %v1972 = vadd.f32 %v1888, %v1971
  %v1973 = vpop.f32.mrb[0].mxu0
  %1974 = vmatprep.mubr.f32.mxu0 0.0
  %1975 = vmatmul.mubr.f32.gmra.mrb[0].mxu0 %v1894
  %v1976 = vpop.f32.mrb[0].mxu0
  %v1977 = vadd.f32 %v1888, %v1976
  %v1978 = vpop.f32.mrb[0].mxu0
  %1979 = vmatprep.mubr.f32.mxu0 0.0
  %1980 = vmatmul.mubr.f32.gmra.mrb[0].mxu0 %v1897
  %v1981 = vpop.f32.mrb[0].mxu0
  %v1982 = vadd.f32 %v1888, %v1981
  %v1983 = vpop.f32.mrb[0].mxu0
  %1984 = vmatprep.mubr.f32.mxu0 0.0
  %1985 = vmatmul.mubr.f32.gmra.mrb[0].mxu0 %v1900
  %v1986 = vpop.f32.mrb[0].mxu0
  %v1987 = vadd.f32 %v1888, %v1986
  %v1988 = vpop.f32.mrb[0].mxu0
  %1989 = vdwg.mxu0
  %v1990 = vlaneseq
  %v1991 = vshrl.u32 %v1990, 7
  %v1992 = vsub.s32 1, %v1991
  %v1993 = vrot.slane %v20, %v1992
  %v1995 = vsel %vm116, %v1972, 0
  %v1998 = vsel %vm116, %v1977, 0
  %v2001 = vsel %vm116, %v1982, 0
  %v2004 = vsel %vm116, %v1987, 0
  %v2007 = vsel %vm129, %v19, 0
  %2009 = vmatprep.subr.mxu0 0.0
  %2010 = vmatpush1.msra.mxu0 %v2007
  %2011 = vmatprep.subr.mxu0 0.0
  %2012 = vmatpush1.msra.mxu0 0.0
  %2013 = vmatprep.subr.mxu0 0.0
  %2014 = vmatpush1.msra.mxu0 0.0
  %2015 = vmatprep.subr.mxu0 0.0
  %2016 = vmatpush1.msra.mxu0 0.0
  %2017 = vmatprep.subr.mxu0 0.0
  %2018 = vmatpush1.msra.mxu0 0.0
  %2019 = vmatprep.subr.mxu0 0.0
  %2020 = vmatpush1.msra.mxu0 0.0
  %2021 = vmatprep.subr.mxu0 0.0
  %2022 = vmatpush1.msra.mxu0 0.0
  %2023 = vmatprep.subr.mxu0 0.0
  %2024 = vmatpush1.msra.mxu0 0.0
  %2025 = vmatprep.subr.mxu0 0.0
  %2026 = vmatpush1.msra.mxu0 0.0
  %2027 = vmatprep.subr.mxu0 0.0
  %2028 = vmatpush1.msra.mxu0 0.0
  %2029 = vmatprep.subr.mxu0 0.0
  %2030 = vmatpush1.msra.mxu0 0.0
  %2031 = vmatprep.subr.mxu0 0.0
  %2032 = vmatpush1.msra.mxu0 0.0
  %2033 = vmatprep.subr.mxu0 0.0
  %2034 = vmatpush1.msra.mxu0 0.0
  %2035 = vmatprep.subr.mxu0 0.0
  %2036 = vmatpush1.msra.mxu0 0.0
  %2037 = vmatprep.subr.mxu0 0.0
  %2038 = vmatpush1.msra.mxu0 0.0
  %2039 = vmatprep.subr.mxu0 0.0
  %2040 = vmatpush1.msra.mxu0 0.0
  %2041 = vmatprep.subr.mxu0 0.0
  %2042 = vmatpush1.msra.mxu0 0.0
  %2043 = vmatprep.subr.mxu0 0.0
  %2044 = vmatpush1.msra.mxu0 0.0
  %2045 = vmatprep.subr.mxu0 0.0
  %2046 = vmatpush1.msra.mxu0 0.0
  %2047 = vmatprep.subr.mxu0 0.0
  %2048 = vmatpush1.msra.mxu0 0.0
  %2049 = vmatprep.subr.mxu0 0.0
  %2050 = vmatpush1.msra.mxu0 0.0
  %2051 = vmatprep.subr.mxu0 0.0
  %2052 = vmatpush1.msra.mxu0 0.0
  %2053 = vmatprep.subr.mxu0 0.0
  %2054 = vmatpush1.msra.mxu0 0.0
  %2055 = vmatprep.subr.mxu0 0.0
  %2056 = vmatpush1.msra.mxu0 0.0
  %2057 = vmatprep.subr.mxu0 0.0
  %2058 = vmatpush1.msra.mxu0 0.0
  %2059 = vmatprep.subr.mxu0 0.0
  %2060 = vmatpush1.msra.mxu0 0.0
  %2061 = vmatprep.subr.mxu0 0.0
  %2062 = vmatpush1.msra.mxu0 0.0
  %2063 = vmatprep.subr.mxu0 0.0
  %2064 = vmatpush1.msra.mxu0 0.0
  %2065 = vmatprep.subr.mxu0 0.0
  %2066 = vmatpush1.msra.mxu0 0.0
  %2067 = vmatprep.subr.mxu0 0.0
  %2068 = vmatpush1.msra.mxu0 0.0
  %2069 = vmatprep.subr.mxu0 0.0
  %2070 = vmatpush1.msra.mxu0 0.0
  %2071 = vmatprep.subr.mxu0 0.0
  %2072 = vmatpush1.msra.mxu0 0.0
  %2073 = vmatprep.mubr.f32.mxu0 0.0
  %2074 = vmatmul.mubr.f32.gmra.mrb[0].mxu0 %v1995
  %v2075 = vpop.f32.mrb[0].mxu0
  %v2076 = vadd.f32 %v1993, %v2075
  %v2077 = vpop.f32.mrb[0].mxu0
  %2078 = vmatprep.mubr.f32.mxu0 0.0
  %2079 = vmatmul.mubr.f32.gmra.mrb[0].mxu0 %v1998
  %v2080 = vpop.f32.mrb[0].mxu0
  %v2081 = vadd.f32 %v1993, %v2080
  %v2082 = vpop.f32.mrb[0].mxu0
  %2083 = vmatprep.mubr.f32.mxu0 0.0
  %2084 = vmatmul.mubr.f32.gmra.mrb[0].mxu0 %v2001
  %v2085 = vpop.f32.mrb[0].mxu0
  %v2086 = vadd.f32 %v1993, %v2085
  %v2087 = vpop.f32.mrb[0].mxu0
  %2088 = vmatprep.mubr.f32.mxu0 0.0
  %2089 = vmatmul.mubr.f32.gmra.mrb[0].mxu0 %v2004
  %v2090 = vpop.f32.mrb[0].mxu0
  %v2091 = vadd.f32 %v1993, %v2090
  %v2092 = vpop.f32.mrb[0].mxu0
  %2093 = vdwg.mxu0
  %2094 = vst [vmem:[%s2] sm:$0xff] %v2076
  %2095 = vst [vmem:[%s2 + $0x8] sm:$0xff] %v2081
  %2096 = vst [vmem:[%s2 + $0x10] sm:$0xff] %v2086
  %2097 = vst [vmem:[%s2 + $0x18] sm:$0xff] %v2091
  // Predicated region
  $region10: #{_forward.1} parent=0 // pred_check
    _
  $region11: #{_forward.1} parent=0 // pred_check_branch
    %2099 = sbr.rel (0) target = $region13
  $region12: #{_forward.1} parent=0 // pred_region
    _
  $region13: #{_forward.1} parent=0 // pred_fallthru
    _
  // Predicated region
  $region14: #{_forward.1} parent=0 // pred_check
    _
  $region15: #{_forward.1} parent=0 // pred_check_branch
    %2101 = sbr.rel (0) target = $region17
  $region16: #{_forward.1} parent=0 // pred_region
    _
  $region17: #{_forward.1} parent=0 // pred_fallthru
    _

</llo_original>
